<compile_context>
chip_gen: v5e
topology: v5e:2x2
jax: 0.10.0
libtpu: 0.0.40
codegen_flags: <defaults>
</compile_context>

<pallas_src>
import functools

import jax
import jax.numpy as jnp
from jax.experimental import pallas as pl
from jax.experimental.pallas import tpu as pltpu


# ---------------------------------------------------------------------------
# Fused Pallas kernel
# ---------------------------------------------------------------------------
def _gru_cell(gi, h, w_hh_bf16, b_hh, H):
    """One GRU step. gi = x@W_ih + b_ih (precomputed, f32). Gate order [r,z,n]."""
    # TODO(synk): verify via bundle dump that the 128x384 bf16 W_hh stays
    # latched in the MXU across the unrolled time loop; if Mosaic re-pushes it
    # each step, drive explicitly with pltpu.matmul_push_rhs / matmul_acc_lhs.
    # (On v5e the 384-wide RHS is 3 weight tiles; check the fan-out there.)
    gh = jnp.dot(h.astype(jnp.bfloat16), w_hh_bf16,
                 preferred_element_type=jnp.float32) + b_hh
    # Single EUP dispatch for both r and z (columns [0, 2H)).
    rz = jax.nn.sigmoid(gi[:, :2 * H] + gh[:, :2 * H])
    r = rz[:, :H]
    z = rz[:, H:]
    n = jnp.tanh(gi[:, 2 * H:] + r * gh[:, 2 * H:])
    return (1.0 - z) * n + z * h


def seq2seq_kernel(gi_enc_ref, len_ref,
                   ewhh_ref, ebhh_ref,
                   gi_dec_ref,
                   dwhh_ref, dbhh_ref,
                   wout_ref, bout_ref,
                   logits_ref, hdec_ref,
                   hs_scratch,
                   *, T_in, T_out, B, H):
    # ---------------- Encoder recurrence ----------------
    e_whh = ewhh_ref[...]
    e_bhh = ebhh_ref[...]
    # pack_padded_sequence would raise for len < 1 or len > T_in; clamp here.
    lens = jnp.clip(len_ref[...], 1, T_in)              # (B, 1) int32

    h = jnp.zeros((B, H), jnp.float32)
    h_enc = jnp.zeros((B, H), jnp.float32)
    for t in range(T_in):                                # fully unrolled, static
        gi = gi_enc_ref[t * B:(t + 1) * B, :]            # (B, 3H) straight from VMEM
        h = _gru_cell(gi, h, e_whh, e_bhh, H)
        # final hidden at step input_len-1 (pack_padded_sequence semantics)
        h_enc = jnp.where(lens == (t + 1), h, h_enc)

    # ---------------- Decoder recurrence ----------------
    d_whh = dwhh_ref[...]
    d_bhh = dbhh_ref[...]
    h = h_enc
    for t in range(T_out):                               # fully unrolled, static
        gi = gi_dec_ref[t * B:(t + 1) * B, :]
        h = _gru_cell(gi, h, d_whh, d_bhh, H)
        hs_scratch[t * B:(t + 1) * B, :] = h             # (8,128)-aligned store
    hdec_ref[...] = h

    # Fused vocab projection: one lane-dense (T_out*B, H)@(H, V) matmul.
    # TODO(synk): at realistic V this needs a V-tiled grid (lane-dense >=512
    # blocks) to respect v7x's 64 MiB VMEM; unnecessary at V = 128.
    logits_ref[...] = jnp.dot(hs_scratch[...].astype(jnp.bfloat16), wout_ref[...],
                              preferred_element_type=jnp.float32) + bout_ref[...]


# ---------------------------------------------------------------------------
# Wrapper
# ---------------------------------------------------------------------------
@jax.jit
def seq2seq_forward(prepped, inp_tokens, tgt_tokens, input_len, target_len):
    """Full Seq2seq.forward.

    Returns (decoder_outputs (T_out, B, V), decoder_hidden (B, H))."""
    del target_len  # matches PyTorch: target_len unused by the decoder call
    B, T_in = inp_tokens.shape
    _, T_out = tgt_tokens.shape
    H = prepped["enc_w_hh"].shape[0]
    V = prepped["dec_w_out"].shape[1]
    # Sublane/lane alignment of the in-kernel row/column slices.
    assert B % 8 == 0 and H % 128 == 0 and V % 128 == 0

    # TODO(synk): nn.Embedding's token-id row gather has no clean Pallas
    # equivalent at these sizes; it is folded with W_ih + b_ih into the
    # precomputed G tables and done as one jnp.take per GRU, in time-major
    # order so row t*B + b is token (b, t).
    gi_enc = jnp.take(prepped["enc_gi_table"], inp_tokens.T.reshape(-1), axis=0)
    gi_dec = jnp.take(prepped["dec_gi_table"], tgt_tokens.T.reshape(-1), axis=0)
    len2d = input_len.reshape(B, 1).astype(jnp.int32)

    kernel = functools.partial(seq2seq_kernel, T_in=T_in, T_out=T_out, B=B, H=H)

    # Single grid-less pallas_call: every operand (<1 MiB total) is
    # VMEM-resident on all generations (v5e/v6e 128 MiB, v7x 64 MiB), so no
    # BlockSpec tiling / pipelining is needed.  At B >= 16 on v7x the batch
    # could be split across the two TensorCores; skipped at B = 8.
    logits, dec_hidden = pl.pallas_call(
        kernel,
        out_shape=(jax.ShapeDtypeStruct((T_out * B, V), jnp.float32),
                   jax.ShapeDtypeStruct((B, H), jnp.float32)),
        scratch_shapes=[pltpu.VMEM((T_out * B, H), jnp.float32)],
    )(gi_enc, len2d,
      prepped["enc_w_hh"], prepped["enc_b_hh"],
      gi_dec,
      prepped["dec_w_hh"], prepped["dec_b_hh"],
      prepped["dec_w_out"], prepped["dec_b_out"])

    decoder_outputs = logits.reshape(T_out, B, V)
    return decoder_outputs, dec_hidden


# ---------------------------------------------------------------------------
# Parameters: raw PyTorch-like f32 params + one-time kernel-ready prep
# ---------------------------------------------------------------------------
def make_params(key, vocab, hidden):
    scale = 1.0 / jnp.sqrt(hidden)
    ks = jax.random.split(key, 12)

    def u(k, shape):
        return jax.random.uniform(k, shape, jnp.float32, -scale, scale)

    return {
        # encoder
        "enc_emb": u(ks[0], (vocab, hidden)),
        "enc_w_ih": u(ks[1], (hidden, 3 * hidden)),   # stored transposed vs torch
        "enc_w_hh": u(ks[2], (hidden, 3 * hidden)),
        "enc_b_ih": u(ks[3], (1, 3 * hidden)),
        "enc_b_hh": u(ks[4], (1, 3 * hidden)),
        # decoder
        "dec_emb": u(ks[5], (vocab, hidden)),
        "dec_w_ih": u(ks[6], (hidden, 3 * hidden)),
        "dec_w_hh": u(ks[7], (hidden, 3 * hidden)),
        "dec_b_ih": u(ks[8], (1, 3 * hidden)),
        "dec_b_hh": u(ks[9], (1, 3 * hidden)),
        "dec_w_out": u(ks[10], (hidden, vocab)),
        "dec_b_out": u(ks[11], (1, vocab)),
    }


def prep_params(raw):
    """One-time (outside jit) kernel-ready params: folded embedding/W_ih tables
    and bf16-cast matmul weights (perf review items #1 and #2)."""
    hi = jax.lax.Precision.HIGHEST
    bf = jnp.bfloat16
    return {
        "enc_gi_table": jnp.dot(raw["enc_emb"], raw["enc_w_ih"], precision=hi)
                        + raw["enc_b_ih"],
        "dec_gi_table": jnp.dot(raw["dec_emb"], raw["dec_w_ih"], precision=hi)
                        + raw["dec_b_ih"],
        "enc_w_hh": raw["enc_w_hh"].astype(bf),
        "enc_b_hh": raw["enc_b_hh"],
        "dec_w_hh": raw["dec_w_hh"].astype(bf),
        "dec_b_hh": raw["dec_b_hh"],
        "dec_w_out": raw["dec_w_out"].astype(bf),
        "dec_b_out": raw["dec_b_out"],
    }


# ---------------------------------------------------------------------------
# Pure-JAX f32 reference (mirrors the PyTorch module) for validation
# ---------------------------------------------------------------------------
def seq2seq_reference(raw, inp_tokens, tgt_tokens, input_len):
    H = raw["enc_w_hh"].shape[0]

    def gru(x_seq, h0, w_ih, w_hh, b_ih, b_hh):
        def step(h, x):
            gi = x @ w_ih + b_ih
            gh = h @ w_hh + b_hh
            r = jax.nn.sigmoid(gi[:, :H] + gh[:, :H])
            z = jax.nn.sigmoid(gi[:, H:2 * H] + gh[:, H:2 * H])
            n = jnp.tanh(gi[:, 2 * H:] + r * gh[:, 2 * H:])
            hn = (1.0 - z) * n + z * h
            return hn, hn
        _, hs = jax.lax.scan(step, h0, x_seq)
        return hs

    B = inp_tokens.shape[0]
    x_enc = raw["enc_emb"][inp_tokens.T]                 # (T_in, B, H)
    hs_enc = gru(x_enc, jnp.zeros((B, H), jnp.float32),
                 raw["enc_w_ih"], raw["enc_w_hh"],
                 raw["enc_b_ih"], raw["enc_b_hh"])
    h_enc = hs_enc[input_len - 1, jnp.arange(B), :]      # hidden at step len-1
    x_dec = raw["dec_emb"][tgt_tokens.T]                 # (T_out, B, H)
    hs_dec = gru(x_dec, h_enc,
                 raw["dec_w_ih"], raw["dec_w_hh"],
                 raw["dec_b_ih"], raw["dec_b_hh"])
    logits = hs_dec @ raw["dec_w_out"] + raw["dec_b_out"]
    return logits, hs_dec[-1]


if __name__ == "__main__":
    VOCAB, HIDDEN = 128, 128
    B, T_IN, T_OUT = 8, 8, 8

    key = jax.random.PRNGKey(0)
    k_param, k_in, k_tgt, k_len = jax.random.split(key, 4)
    raw = make_params(k_param, VOCAB, HIDDEN)
    prepped = prep_params(raw)          # one-time, outside jit

    inp_tokens = jax.random.randint(k_in, (B, T_IN), 0, VOCAB, jnp.int32)
    tgt_tokens = jax.random.randint(k_tgt, (B, T_OUT), 0, VOCAB, jnp.int32)
    input_len = jax.random.randint(k_len, (B,), 1, T_IN + 1, jnp.int32)
    target_len = jnp.full((B,), T_OUT, jnp.int32)

    dec_out, dec_hidden = seq2seq_forward(
        prepped, inp_tokens, tgt_tokens, input_len, target_len)
    jax.block_until_ready((dec_out, dec_hidden))

    assert dec_out.shape == (T_OUT, B, VOCAB)
    assert dec_hidden.shape == (B, HIDDEN)
    assert jnp.all(jnp.isfinite(dec_out)) and jnp.all(jnp.isfinite(dec_hidden))

    # Validate against the f32 reference (bf16 MXU operands -> loose tolerance).
    ref_out, ref_hidden = seq2seq_reference(raw, inp_tokens, tgt_tokens, input_len)
    assert float(jnp.max(jnp.abs(dec_out - ref_out))) < 2e-2
    assert float(jnp.max(jnp.abs(dec_hidden - ref_hidden))) < 2e-2

    print("KERNEL_OK")
</pallas_src>

<mosaic_0001>
module attributes {stable_mosaic.version = 11 : i64} {
  func.func @seq2seq_kernel(%arg0: memref<64x384xf32, #tpu.memory_space<vmem>>, %arg1: memref<8x1xi32, #tpu.memory_space<vmem>>, %arg2: memref<128x384xbf16, #tpu.memory_space<vmem>>, %arg3: memref<1x384xf32, #tpu.memory_space<vmem>>, %arg4: memref<64x384xf32, #tpu.memory_space<vmem>>, %arg5: memref<128x384xbf16, #tpu.memory_space<vmem>>, %arg6: memref<1x384xf32, #tpu.memory_space<vmem>>, %arg7: memref<128x128xbf16, #tpu.memory_space<vmem>>, %arg8: memref<1x128xf32, #tpu.memory_space<vmem>>, %arg9: memref<64x128xf32, #tpu.memory_space<vmem>>, %arg10: memref<8x128xf32, #tpu.memory_space<vmem>>, %arg11: memref<64x128xf32, #tpu.memory_space<vmem>>) attributes {dimension_semantics = [], scalar_prefetch = 0 : i64, scratch_operands = 1 : i64, tpu.core_type = #tpu.core_type<tc>} {
    %c0 = arith.constant 0 : index
    %c0_0 = arith.constant 0 : index
    %0 = vector.load %arg2[%c0, %c0_0] : memref<128x384xbf16, #tpu.memory_space<vmem>>, vector<128x384xbf16>
    %c0_1 = arith.constant 0 : index
    %c0_2 = arith.constant 0 : index
    %1 = vector.load %arg3[%c0_1, %c0_2] : memref<1x384xf32, #tpu.memory_space<vmem>>, vector<1x384xf32>
    %c0_3 = arith.constant 0 : index
    %c0_4 = arith.constant 0 : index
    %2 = vector.load %arg1[%c0_3, %c0_4] : memref<8x1xi32, #tpu.memory_space<vmem>>, vector<8x1xi32>
    %c1_i32 = arith.constant 1 : i32
    %c8_i32 = arith.constant 8 : i32
    %3 = vector.broadcast %c1_i32 : i32 to vector<8x1xi32>
    %4 = arith.maxsi %3, %2 : vector<8x1xi32>
    %5 = vector.broadcast %c8_i32 : i32 to vector<8x1xi32>
    %6 = arith.minsi %5, %4 : vector<8x1xi32>
    %cst = arith.constant 0.000000e+00 : f32
    %7 = vector.broadcast %cst : f32 to vector<8x128xf32>
    %cst_5 = arith.constant 0.000000e+00 : f32
    %8 = vector.broadcast %cst_5 : f32 to vector<8x128xf32>
    %c0_6 = arith.constant 0 : index
    %c0_7 = arith.constant 0 : index
    %9 = vector.load %arg0[%c0_6, %c0_7] : memref<64x384xf32, #tpu.memory_space<vmem>>, vector<8x384xf32>
    %10 = arith.truncf %7 : vector<8x128xf32> to vector<8x128xbf16>
    %cst_8 = arith.constant dense<0.000000e+00> : vector<8x384xf32>
    %11 = tpu.matmul %10, %0, %cst_8 {dimension_numbers = #tpu.dot_dimension_numbers<[1], [0], [0], [1], [0, 0, 1, 1], [], []>} : vector<8x128xbf16>, vector<128x384xbf16>, vector<8x384xf32> -> vector<8x384xf32>
    %12 = vector.broadcast %1 : vector<1x384xf32> to vector<8x384xf32>
    %13 = arith.addf %11, %12 : vector<8x384xf32>
    %14 = vector.extract_strided_slice %9 {offsets = [0, 0], sizes = [8, 256], strides = [1, 1]} : vector<8x384xf32> to vector<8x256xf32>
    %15 = vector.extract_strided_slice %13 {offsets = [0, 0], sizes = [8, 256], strides = [1, 1]} : vector<8x384xf32> to vector<8x256xf32>
    %16 = arith.addf %14, %15 : vector<8x256xf32>
    %17 = arith.negf %16 : vector<8x256xf32>
    %18 = math.exp %17 : vector<8x256xf32>
    %cst_9 = arith.constant 1.000000e+00 : f32
    %19 = vector.broadcast %cst_9 : f32 to vector<8x256xf32>
    %20 = arith.addf %19, %18 : vector<8x256xf32>
    %21 = arith.divf %19, %20 : vector<8x256xf32>
    %22 = vector.extract_strided_slice %21 {offsets = [0, 0], sizes = [8, 128], strides = [1, 1]} : vector<8x256xf32> to vector<8x128xf32>
    %23 = vector.extract_strided_slice %21 {offsets = [0, 128], sizes = [8, 128], strides = [1, 1]} : vector<8x256xf32> to vector<8x128xf32>
    %24 = vector.extract_strided_slice %9 {offsets = [0, 256], sizes = [8, 128], strides = [1, 1]} : vector<8x384xf32> to vector<8x128xf32>
    %25 = vector.extract_strided_slice %13 {offsets = [0, 256], sizes = [8, 128], strides = [1, 1]} : vector<8x384xf32> to vector<8x128xf32>
    %26 = arith.mulf %22, %25 : vector<8x128xf32>
    %27 = arith.addf %24, %26 : vector<8x128xf32>
    %28 = math.tanh %27 : vector<8x128xf32>
    %cst_10 = arith.constant 1.000000e+00 : f32
    %29 = vector.broadcast %cst_10 : f32 to vector<8x128xf32>
    %30 = arith.subf %29, %23 : vector<8x128xf32>
    %31 = arith.mulf %30, %28 : vector<8x128xf32>
    %32 = arith.mulf %23, %7 : vector<8x128xf32>
    %33 = arith.addf %31, %32 : vector<8x128xf32>
    %c1_i32_11 = arith.constant 1 : i32
    %34 = vector.broadcast %c1_i32_11 : i32 to vector<8x1xi32>
    %35 = arith.cmpi eq, %6, %34 : vector<8x1xi32>
    %36 = vector.shape_cast %35 : vector<8x1xi1> to vector<8x1xi1>
    %37 = vector.broadcast %36 : vector<8x1xi1> to vector<8x128xi1>
    %38 = arith.select %37, %33, %8 : vector<8x128xi1>, vector<8x128xf32>
    %c8 = arith.constant 8 : index
    %c0_12 = arith.constant 0 : index
    %39 = vector.load %arg0[%c8, %c0_12] : memref<64x384xf32, #tpu.memory_space<vmem>>, vector<8x384xf32>
    %40 = arith.truncf %33 : vector<8x128xf32> to vector<8x128xbf16>
    %cst_13 = arith.constant dense<0.000000e+00> : vector<8x384xf32>
    %41 = tpu.matmul %40, %0, %cst_13 {dimension_numbers = #tpu.dot_dimension_numbers<[1], [0], [0], [1], [0, 0, 1, 1], [], []>} : vector<8x128xbf16>, vector<128x384xbf16>, vector<8x384xf32> -> vector<8x384xf32>
    %42 = vector.broadcast %1 : vector<1x384xf32> to vector<8x384xf32>
    %43 = arith.addf %41, %42 : vector<8x384xf32>
    %44 = vector.extract_strided_slice %39 {offsets = [0, 0], sizes = [8, 256], strides = [1, 1]} : vector<8x384xf32> to vector<8x256xf32>
    %45 = vector.extract_strided_slice %43 {offsets = [0, 0], sizes = [8, 256], strides = [1, 1]} : vector<8x384xf32> to vector<8x256xf32>
    %46 = arith.addf %44, %45 : vector<8x256xf32>
    %47 = arith.negf %46 : vector<8x256xf32>
    %48 = math.exp %47 : vector<8x256xf32>
    %cst_14 = arith.constant 1.000000e+00 : f32
    %49 = vector.broadcast %cst_14 : f32 to vector<8x256xf32>
    %50 = arith.addf %49, %48 : vector<8x256xf32>
    %51 = arith.divf %49, %50 : vector<8x256xf32>
    %52 = vector.extract_strided_slice %51 {offsets = [0, 0], sizes = [8, 128], strides = [1, 1]} : vector<8x256xf32> to vector<8x128xf32>
    %53 = vector.extract_strided_slice %51 {offsets = [0, 128], sizes = [8, 128], strides = [1, 1]} : vector<8x256xf32> to vector<8x128xf32>
    %54 = vector.extract_strided_slice %39 {offsets = [0, 256], sizes = [8, 128], strides = [1, 1]} : vector<8x384xf32> to vector<8x128xf32>
    %55 = vector.extract_strided_slice %43 {offsets = [0, 256], sizes = [8, 128], strides = [1, 1]} : vector<8x384xf32> to vector<8x128xf32>
    %56 = arith.mulf %52, %55 : vector<8x128xf32>
    %57 = arith.addf %54, %56 : vector<8x128xf32>
    %58 = math.tanh %57 : vector<8x128xf32>
    %cst_15 = arith.constant 1.000000e+00 : f32
    %59 = vector.broadcast %cst_15 : f32 to vector<8x128xf32>
    %60 = arith.subf %59, %53 : vector<8x128xf32>
    %61 = arith.mulf %60, %58 : vector<8x128xf32>
    %62 = arith.mulf %53, %33 : vector<8x128xf32>
    %63 = arith.addf %61, %62 : vector<8x128xf32>
    %c2_i32 = arith.constant 2 : i32
    %64 = vector.broadcast %c2_i32 : i32 to vector<8x1xi32>
    %65 = arith.cmpi eq, %6, %64 : vector<8x1xi32>
    %66 = vector.shape_cast %65 : vector<8x1xi1> to vector<8x1xi1>
    %67 = vector.broadcast %66 : vector<8x1xi1> to vector<8x128xi1>
    %68 = arith.select %67, %63, %38 : vector<8x128xi1>, vector<8x128xf32>
    %c16 = arith.constant 16 : index
    %c0_16 = arith.constant 0 : index
    %69 = vector.load %arg0[%c16, %c0_16] : memref<64x384xf32, #tpu.memory_space<vmem>>, vector<8x384xf32>
    %70 = arith.truncf %63 : vector<8x128xf32> to vector<8x128xbf16>
    %cst_17 = arith.constant dense<0.000000e+00> : vector<8x384xf32>
    %71 = tpu.matmul %70, %0, %cst_17 {dimension_numbers = #tpu.dot_dimension_numbers<[1], [0], [0], [1], [0, 0, 1, 1], [], []>} : vector<8x128xbf16>, vector<128x384xbf16>, vector<8x384xf32> -> vector<8x384xf32>
    %72 = vector.broadcast %1 : vector<1x384xf32> to vector<8x384xf32>
    %73 = arith.addf %71, %72 : vector<8x384xf32>
    %74 = vector.extract_strided_slice %69 {offsets = [0, 0], sizes = [8, 256], strides = [1, 1]} : vector<8x384xf32> to vector<8x256xf32>
    %75 = vector.extract_strided_slice %73 {offsets = [0, 0], sizes = [8, 256], strides = [1, 1]} : vector<8x384xf32> to vector<8x256xf32>
    %76 = arith.addf %74, %75 : vector<8x256xf32>
    %77 = arith.negf %76 : vector<8x256xf32>
    %78 = math.exp %77 : vector<8x256xf32>
    %cst_18 = arith.constant 1.000000e+00 : f32
    %79 = vector.broadcast %cst_18 : f32 to vector<8x256xf32>
    %80 = arith.addf %79, %78 : vector<8x256xf32>
    %81 = arith.divf %79, %80 : vector<8x256xf32>
    %82 = vector.extract_strided_slice %81 {offsets = [0, 0], sizes = [8, 128], strides = [1, 1]} : vector<8x256xf32> to vector<8x128xf32>
    %83 = vector.extract_strided_slice %81 {offsets = [0, 128], sizes = [8, 128], strides = [1, 1]} : vector<8x256xf32> to vector<8x128xf32>
    %84 = vector.extract_strided_slice %69 {offsets = [0, 256], sizes = [8, 128], strides = [1, 1]} : vector<8x384xf32> to vector<8x128xf32>
    %85 = vector.extract_strided_slice %73 {offsets = [0, 256], sizes = [8, 128], strides = [1, 1]} : vector<8x384xf32> to vector<8x128xf32>
    %86 = arith.mulf %82, %85 : vector<8x128xf32>
    %87 = arith.addf %84, %86 : vector<8x128xf32>
    %88 = math.tanh %87 : vector<8x128xf32>
    %cst_19 = arith.constant 1.000000e+00 : f32
    %89 = vector.broadcast %cst_19 : f32 to vector<8x128xf32>
    %90 = arith.subf %89, %83 : vector<8x128xf32>
    %91 = arith.mulf %90, %88 : vector<8x128xf32>
    %92 = arith.mulf %83, %63 : vector<8x128xf32>
    %93 = arith.addf %91, %92 : vector<8x128xf32>
    %c3_i32 = arith.constant 3 : i32
    %94 = vector.broadcast %c3_i32 : i32 to vector<8x1xi32>
    %95 = arith.cmpi eq, %6, %94 : vector<8x1xi32>
    %96 = vector.shape_cast %95 : vector<8x1xi1> to vector<8x1xi1>
    %97 = vector.broadcast %96 : vector<8x1xi1> to vector<8x128xi1>
    %98 = arith.select %97, %93, %68 : vector<8x128xi1>, vector<8x128xf32>
    %c24 = arith.constant 24 : index
    %c0_20 = arith.constant 0 : index
    %99 = vector.load %arg0[%c24, %c0_20] : memref<64x384xf32, #tpu.memory_space<vmem>>, vector<8x384xf32>
    %100 = arith.truncf %93 : vector<8x128xf32> to vector<8x128xbf16>
    %cst_21 = arith.constant dense<0.000000e+00> : vector<8x384xf32>
    %101 = tpu.matmul %100, %0, %cst_21 {dimension_numbers = #tpu.dot_dimension_numbers<[1], [0], [0], [1], [0, 0, 1, 1], [], []>} : vector<8x128xbf16>, vector<128x384xbf16>, vector<8x384xf32> -> vector<8x384xf32>
    %102 = vector.broadcast %1 : vector<1x384xf32> to vector<8x384xf32>
    %103 = arith.addf %101, %102 : vector<8x384xf32>
    %104 = vector.extract_strided_slice %99 {offsets = [0, 0], sizes = [8, 256], strides = [1, 1]} : vector<8x384xf32> to vector<8x256xf32>
    %105 = vector.extract_strided_slice %103 {offsets = [0, 0], sizes = [8, 256], strides = [1, 1]} : vector<8x384xf32> to vector<8x256xf32>
    %106 = arith.addf %104, %105 : vector<8x256xf32>
    %107 = arith.negf %106 : vector<8x256xf32>
    %108 = math.exp %107 : vector<8x256xf32>
    %cst_22 = arith.constant 1.000000e+00 : f32
    %109 = vector.broadcast %cst_22 : f32 to vector<8x256xf32>
    %110 = arith.addf %109, %108 : vector<8x256xf32>
    %111 = arith.divf %109, %110 : vector<8x256xf32>
    %112 = vector.extract_strided_slice %111 {offsets = [0, 0], sizes = [8, 128], strides = [1, 1]} : vector<8x256xf32> to vector<8x128xf32>
    %113 = vector.extract_strided_slice %111 {offsets = [0, 128], sizes = [8, 128], strides = [1, 1]} : vector<8x256xf32> to vector<8x128xf32>
    %114 = vector.extract_strided_slice %99 {offsets = [0, 256], sizes = [8, 128], strides = [1, 1]} : vector<8x384xf32> to vector<8x128xf32>
    %115 = vector.extract_strided_slice %103 {offsets = [0, 256], sizes = [8, 128], strides = [1, 1]} : vector<8x384xf32> to vector<8x128xf32>
    %116 = arith.mulf %112, %115 : vector<8x128xf32>
    %117 = arith.addf %114, %116 : vector<8x128xf32>
    %118 = math.tanh %117 : vector<8x128xf32>
    %cst_23 = arith.constant 1.000000e+00 : f32
    %119 = vector.broadcast %cst_23 : f32 to vector<8x128xf32>
    %120 = arith.subf %119, %113 : vector<8x128xf32>
    %121 = arith.mulf %120, %118 : vector<8x128xf32>
    %122 = arith.mulf %113, %93 : vector<8x128xf32>
    %123 = arith.addf %121, %122 : vector<8x128xf32>
    %c4_i32 = arith.constant 4 : i32
    %124 = vector.broadcast %c4_i32 : i32 to vector<8x1xi32>
    %125 = arith.cmpi eq, %6, %124 : vector<8x1xi32>
    %126 = vector.shape_cast %125 : vector<8x1xi1> to vector<8x1xi1>
    %127 = vector.broadcast %126 : vector<8x1xi1> to vector<8x128xi1>
    %128 = arith.select %127, %123, %98 : vector<8x128xi1>, vector<8x128xf32>
    %c32 = arith.constant 32 : index
    %c0_24 = arith.constant 0 : index
    %129 = vector.load %arg0[%c32, %c0_24] : memref<64x384xf32, #tpu.memory_space<vmem>>, vector<8x384xf32>
    %130 = arith.truncf %123 : vector<8x128xf32> to vector<8x128xbf16>
    %cst_25 = arith.constant dense<0.000000e+00> : vector<8x384xf32>
    %131 = tpu.matmul %130, %0, %cst_25 {dimension_numbers = #tpu.dot_dimension_numbers<[1], [0], [0], [1], [0, 0, 1, 1], [], []>} : vector<8x128xbf16>, vector<128x384xbf16>, vector<8x384xf32> -> vector<8x384xf32>
    %132 = vector.broadcast %1 : vector<1x384xf32> to vector<8x384xf32>
    %133 = arith.addf %131, %132 : vector<8x384xf32>
    %134 = vector.extract_strided_slice %129 {offsets = [0, 0], sizes = [8, 256], strides = [1, 1]} : vector<8x384xf32> to vector<8x256xf32>
    %135 = vector.extract_strided_slice %133 {offsets = [0, 0], sizes = [8, 256], strides = [1, 1]} : vector<8x384xf32> to vector<8x256xf32>
    %136 = arith.addf %134, %135 : vector<8x256xf32>
    %137 = arith.negf %136 : vector<8x256xf32>
    %138 = math.exp %137 : vector<8x256xf32>
    %cst_26 = arith.constant 1.000000e+00 : f32
    %139 = vector.broadcast %cst_26 : f32 to vector<8x256xf32>
    %140 = arith.addf %139, %138 : vector<8x256xf32>
    %141 = arith.divf %139, %140 : vector<8x256xf32>
    %142 = vector.extract_strided_slice %141 {offsets = [0, 0], sizes = [8, 128], strides = [1, 1]} : vector<8x256xf32> to vector<8x128xf32>
    %143 = vector.extract_strided_slice %141 {offsets = [0, 128], sizes = [8, 128], strides = [1, 1]} : vector<8x256xf32> to vector<8x128xf32>
    %144 = vector.extract_strided_slice %129 {offsets = [0, 256], sizes = [8, 128], strides = [1, 1]} : vector<8x384xf32> to vector<8x128xf32>
    %145 = vector.extract_strided_slice %133 {offsets = [0, 256], sizes = [8, 128], strides = [1, 1]} : vector<8x384xf32> to vector<8x128xf32>
    %146 = arith.mulf %142, %145 : vector<8x128xf32>
    %147 = arith.addf %144, %146 : vector<8x128xf32>
    %148 = math.tanh %147 : vector<8x128xf32>
    %cst_27 = arith.constant 1.000000e+00 : f32
    %149 = vector.broadcast %cst_27 : f32 to vector<8x128xf32>
    %150 = arith.subf %149, %143 : vector<8x128xf32>
    %151 = arith.mulf %150, %148 : vector<8x128xf32>
    %152 = arith.mulf %143, %123 : vector<8x128xf32>
    %153 = arith.addf %151, %152 : vector<8x128xf32>
    %c5_i32 = arith.constant 5 : i32
    %154 = vector.broadcast %c5_i32 : i32 to vector<8x1xi32>
    %155 = arith.cmpi eq, %6, %154 : vector<8x1xi32>
    %156 = vector.shape_cast %155 : vector<8x1xi1> to vector<8x1xi1>
    %157 = vector.broadcast %156 : vector<8x1xi1> to vector<8x128xi1>
    %158 = arith.select %157, %153, %128 : vector<8x128xi1>, vector<8x128xf32>
    %c40 = arith.constant 40 : index
    %c0_28 = arith.constant 0 : index
    %159 = vector.load %arg0[%c40, %c0_28] : memref<64x384xf32, #tpu.memory_space<vmem>>, vector<8x384xf32>
    %160 = arith.truncf %153 : vector<8x128xf32> to vector<8x128xbf16>
    %cst_29 = arith.constant dense<0.000000e+00> : vector<8x384xf32>
    %161 = tpu.matmul %160, %0, %cst_29 {dimension_numbers = #tpu.dot_dimension_numbers<[1], [0], [0], [1], [0, 0, 1, 1], [], []>} : vector<8x128xbf16>, vector<128x384xbf16>, vector<8x384xf32> -> vector<8x384xf32>
    %162 = vector.broadcast %1 : vector<1x384xf32> to vector<8x384xf32>
    %163 = arith.addf %161, %162 : vector<8x384xf32>
    %164 = vector.extract_strided_slice %159 {offsets = [0, 0], sizes = [8, 256], strides = [1, 1]} : vector<8x384xf32> to vector<8x256xf32>
    %165 = vector.extract_strided_slice %163 {offsets = [0, 0], sizes = [8, 256], strides = [1, 1]} : vector<8x384xf32> to vector<8x256xf32>
    %166 = arith.addf %164, %165 : vector<8x256xf32>
    %167 = arith.negf %166 : vector<8x256xf32>
    %168 = math.exp %167 : vector<8x256xf32>
    %cst_30 = arith.constant 1.000000e+00 : f32
    %169 = vector.broadcast %cst_30 : f32 to vector<8x256xf32>
    %170 = arith.addf %169, %168 : vector<8x256xf32>
    %171 = arith.divf %169, %170 : vector<8x256xf32>
    %172 = vector.extract_strided_slice %171 {offsets = [0, 0], sizes = [8, 128], strides = [1, 1]} : vector<8x256xf32> to vector<8x128xf32>
    %173 = vector.extract_strided_slice %171 {offsets = [0, 128], sizes = [8, 128], strides = [1, 1]} : vector<8x256xf32> to vector<8x128xf32>
    %174 = vector.extract_strided_slice %159 {offsets = [0, 256], sizes = [8, 128], strides = [1, 1]} : vector<8x384xf32> to vector<8x128xf32>
    %175 = vector.extract_strided_slice %163 {offsets = [0, 256], sizes = [8, 128], strides = [1, 1]} : vector<8x384xf32> to vector<8x128xf32>
    %176 = arith.mulf %172, %175 : vector<8x128xf32>
    %177 = arith.addf %174, %176 : vector<8x128xf32>
    %178 = math.tanh %177 : vector<8x128xf32>
    %cst_31 = arith.constant 1.000000e+00 : f32
    %179 = vector.broadcast %cst_31 : f32 to vector<8x128xf32>
    %180 = arith.subf %179, %173 : vector<8x128xf32>
    %181 = arith.mulf %180, %178 : vector<8x128xf32>
    %182 = arith.mulf %173, %153 : vector<8x128xf32>
    %183 = arith.addf %181, %182 : vector<8x128xf32>
    %c6_i32 = arith.constant 6 : i32
    %184 = vector.broadcast %c6_i32 : i32 to vector<8x1xi32>
    %185 = arith.cmpi eq, %6, %184 : vector<8x1xi32>
    %186 = vector.shape_cast %185 : vector<8x1xi1> to vector<8x1xi1>
    %187 = vector.broadcast %186 : vector<8x1xi1> to vector<8x128xi1>
    %188 = arith.select %187, %183, %158 : vector<8x128xi1>, vector<8x128xf32>
    %c48 = arith.constant 48 : index
    %c0_32 = arith.constant 0 : index
    %189 = vector.load %arg0[%c48, %c0_32] : memref<64x384xf32, #tpu.memory_space<vmem>>, vector<8x384xf32>
    %190 = arith.truncf %183 : vector<8x128xf32> to vector<8x128xbf16>
    %cst_33 = arith.constant dense<0.000000e+00> : vector<8x384xf32>
    %191 = tpu.matmul %190, %0, %cst_33 {dimension_numbers = #tpu.dot_dimension_numbers<[1], [0], [0], [1], [0, 0, 1, 1], [], []>} : vector<8x128xbf16>, vector<128x384xbf16>, vector<8x384xf32> -> vector<8x384xf32>
    %192 = vector.broadcast %1 : vector<1x384xf32> to vector<8x384xf32>
    %193 = arith.addf %191, %192 : vector<8x384xf32>
    %194 = vector.extract_strided_slice %189 {offsets = [0, 0], sizes = [8, 256], strides = [1, 1]} : vector<8x384xf32> to vector<8x256xf32>
    %195 = vector.extract_strided_slice %193 {offsets = [0, 0], sizes = [8, 256], strides = [1, 1]} : vector<8x384xf32> to vector<8x256xf32>
    %196 = arith.addf %194, %195 : vector<8x256xf32>
    %197 = arith.negf %196 : vector<8x256xf32>
    %198 = math.exp %197 : vector<8x256xf32>
    %cst_34 = arith.constant 1.000000e+00 : f32
    %199 = vector.broadcast %cst_34 : f32 to vector<8x256xf32>
    %200 = arith.addf %199, %198 : vector<8x256xf32>
    %201 = arith.divf %199, %200 : vector<8x256xf32>
    %202 = vector.extract_strided_slice %201 {offsets = [0, 0], sizes = [8, 128], strides = [1, 1]} : vector<8x256xf32> to vector<8x128xf32>
    %203 = vector.extract_strided_slice %201 {offsets = [0, 128], sizes = [8, 128], strides = [1, 1]} : vector<8x256xf32> to vector<8x128xf32>
    %204 = vector.extract_strided_slice %189 {offsets = [0, 256], sizes = [8, 128], strides = [1, 1]} : vector<8x384xf32> to vector<8x128xf32>
    %205 = vector.extract_strided_slice %193 {offsets = [0, 256], sizes = [8, 128], strides = [1, 1]} : vector<8x384xf32> to vector<8x128xf32>
    %206 = arith.mulf %202, %205 : vector<8x128xf32>
    %207 = arith.addf %204, %206 : vector<8x128xf32>
    %208 = math.tanh %207 : vector<8x128xf32>
    %cst_35 = arith.constant 1.000000e+00 : f32
    %209 = vector.broadcast %cst_35 : f32 to vector<8x128xf32>
    %210 = arith.subf %209, %203 : vector<8x128xf32>
    %211 = arith.mulf %210, %208 : vector<8x128xf32>
    %212 = arith.mulf %203, %183 : vector<8x128xf32>
    %213 = arith.addf %211, %212 : vector<8x128xf32>
    %c7_i32 = arith.constant 7 : i32
    %214 = vector.broadcast %c7_i32 : i32 to vector<8x1xi32>
    %215 = arith.cmpi eq, %6, %214 : vector<8x1xi32>
    %216 = vector.shape_cast %215 : vector<8x1xi1> to vector<8x1xi1>
    %217 = vector.broadcast %216 : vector<8x1xi1> to vector<8x128xi1>
    %218 = arith.select %217, %213, %188 : vector<8x128xi1>, vector<8x128xf32>
    %c56 = arith.constant 56 : index
    %c0_36 = arith.constant 0 : index
    %219 = vector.load %arg0[%c56, %c0_36] : memref<64x384xf32, #tpu.memory_space<vmem>>, vector<8x384xf32>
    %220 = arith.truncf %213 : vector<8x128xf32> to vector<8x128xbf16>
    %cst_37 = arith.constant dense<0.000000e+00> : vector<8x384xf32>
    %221 = tpu.matmul %220, %0, %cst_37 {dimension_numbers = #tpu.dot_dimension_numbers<[1], [0], [0], [1], [0, 0, 1, 1], [], []>} : vector<8x128xbf16>, vector<128x384xbf16>, vector<8x384xf32> -> vector<8x384xf32>
    %222 = vector.broadcast %1 : vector<1x384xf32> to vector<8x384xf32>
    %223 = arith.addf %221, %222 : vector<8x384xf32>
    %224 = vector.extract_strided_slice %219 {offsets = [0, 0], sizes = [8, 256], strides = [1, 1]} : vector<8x384xf32> to vector<8x256xf32>
    %225 = vector.extract_strided_slice %223 {offsets = [0, 0], sizes = [8, 256], strides = [1, 1]} : vector<8x384xf32> to vector<8x256xf32>
    %226 = arith.addf %224, %225 : vector<8x256xf32>
    %227 = arith.negf %226 : vector<8x256xf32>
    %228 = math.exp %227 : vector<8x256xf32>
    %cst_38 = arith.constant 1.000000e+00 : f32
    %229 = vector.broadcast %cst_38 : f32 to vector<8x256xf32>
    %230 = arith.addf %229, %228 : vector<8x256xf32>
    %231 = arith.divf %229, %230 : vector<8x256xf32>
    %232 = vector.extract_strided_slice %231 {offsets = [0, 0], sizes = [8, 128], strides = [1, 1]} : vector<8x256xf32> to vector<8x128xf32>
    %233 = vector.extract_strided_slice %231 {offsets = [0, 128], sizes = [8, 128], strides = [1, 1]} : vector<8x256xf32> to vector<8x128xf32>
    %234 = vector.extract_strided_slice %219 {offsets = [0, 256], sizes = [8, 128], strides = [1, 1]} : vector<8x384xf32> to vector<8x128xf32>
    %235 = vector.extract_strided_slice %223 {offsets = [0, 256], sizes = [8, 128], strides = [1, 1]} : vector<8x384xf32> to vector<8x128xf32>
    %236 = arith.mulf %232, %235 : vector<8x128xf32>
    %237 = arith.addf %234, %236 : vector<8x128xf32>
    %238 = math.tanh %237 : vector<8x128xf32>
    %cst_39 = arith.constant 1.000000e+00 : f32
    %239 = vector.broadcast %cst_39 : f32 to vector<8x128xf32>
    %240 = arith.subf %239, %233 : vector<8x128xf32>
    %241 = arith.mulf %240, %238 : vector<8x128xf32>
    %242 = arith.mulf %233, %213 : vector<8x128xf32>
    %243 = arith.addf %241, %242 : vector<8x128xf32>
    %c8_i32_40 = arith.constant 8 : i32
    %244 = vector.broadcast %c8_i32_40 : i32 to vector<8x1xi32>
    %245 = arith.cmpi eq, %6, %244 : vector<8x1xi32>
    %246 = vector.shape_cast %245 : vector<8x1xi1> to vector<8x1xi1>
    %247 = vector.broadcast %246 : vector<8x1xi1> to vector<8x128xi1>
    %248 = arith.select %247, %243, %218 : vector<8x128xi1>, vector<8x128xf32>
    %c0_41 = arith.constant 0 : index
    %c0_42 = arith.constant 0 : index
    %249 = vector.load %arg5[%c0_41, %c0_42] : memref<128x384xbf16, #tpu.memory_space<vmem>>, vector<128x384xbf16>
    %c0_43 = arith.constant 0 : index
    %c0_44 = arith.constant 0 : index
    %250 = vector.load %arg6[%c0_43, %c0_44] : memref<1x384xf32, #tpu.memory_space<vmem>>, vector<1x384xf32>
    %c0_45 = arith.constant 0 : index
    %c0_46 = arith.constant 0 : index
    %251 = vector.load %arg4[%c0_45, %c0_46] : memref<64x384xf32, #tpu.memory_space<vmem>>, vector<8x384xf32>
    %252 = arith.truncf %248 : vector<8x128xf32> to vector<8x128xbf16>
    %cst_47 = arith.constant dense<0.000000e+00> : vector<8x384xf32>
    %253 = tpu.matmul %252, %249, %cst_47 {dimension_numbers = #tpu.dot_dimension_numbers<[1], [0], [0], [1], [0, 0, 1, 1], [], []>} : vector<8x128xbf16>, vector<128x384xbf16>, vector<8x384xf32> -> vector<8x384xf32>
    %254 = vector.broadcast %250 : vector<1x384xf32> to vector<8x384xf32>
    %255 = arith.addf %253, %254 : vector<8x384xf32>
    %256 = vector.extract_strided_slice %251 {offsets = [0, 0], sizes = [8, 256], strides = [1, 1]} : vector<8x384xf32> to vector<8x256xf32>
    %257 = vector.extract_strided_slice %255 {offsets = [0, 0], sizes = [8, 256], strides = [1, 1]} : vector<8x384xf32> to vector<8x256xf32>
    %258 = arith.addf %256, %257 : vector<8x256xf32>
    %259 = arith.negf %258 : vector<8x256xf32>
    %260 = math.exp %259 : vector<8x256xf32>
    %cst_48 = arith.constant 1.000000e+00 : f32
    %261 = vector.broadcast %cst_48 : f32 to vector<8x256xf32>
    %262 = arith.addf %261, %260 : vector<8x256xf32>
    %263 = arith.divf %261, %262 : vector<8x256xf32>
    %264 = vector.extract_strided_slice %263 {offsets = [0, 0], sizes = [8, 128], strides = [1, 1]} : vector<8x256xf32> to vector<8x128xf32>
    %265 = vector.extract_strided_slice %263 {offsets = [0, 128], sizes = [8, 128], strides = [1, 1]} : vector<8x256xf32> to vector<8x128xf32>
    %266 = vector.extract_strided_slice %251 {offsets = [0, 256], sizes = [8, 128], strides = [1, 1]} : vector<8x384xf32> to vector<8x128xf32>
    %267 = vector.extract_strided_slice %255 {offsets = [0, 256], sizes = [8, 128], strides = [1, 1]} : vector<8x384xf32> to vector<8x128xf32>
    %268 = arith.mulf %264, %267 : vector<8x128xf32>
    %269 = arith.addf %266, %268 : vector<8x128xf32>
    %270 = math.tanh %269 : vector<8x128xf32>
    %cst_49 = arith.constant 1.000000e+00 : f32
    %271 = vector.broadcast %cst_49 : f32 to vector<8x128xf32>
    %272 = arith.subf %271, %265 : vector<8x128xf32>
    %273 = arith.mulf %272, %270 : vector<8x128xf32>
    %274 = arith.mulf %265, %248 : vector<8x128xf32>
    %275 = arith.addf %273, %274 : vector<8x128xf32>
    %c0_50 = arith.constant 0 : index
    %c0_51 = arith.constant 0 : index
    %276 = vector.load %arg11[%c0_50, %c0_51] : memref<64x128xf32, #tpu.memory_space<vmem>>, vector<8x128xf32>
    tpu.vector_store %arg11[%c0_50, %c0_51], %275 {strides = array<i32>} : memref<64x128xf32, #tpu.memory_space<vmem>>, vector<8x128xf32>,
    %c8_52 = arith.constant 8 : index
    %c0_53 = arith.constant 0 : index
    %277 = vector.load %arg4[%c8_52, %c0_53] : memref<64x384xf32, #tpu.memory_space<vmem>>, vector<8x384xf32>
    %278 = arith.truncf %275 : vector<8x128xf32> to vector<8x128xbf16>
    %cst_54 = arith.constant dense<0.000000e+00> : vector<8x384xf32>
    %279 = tpu.matmul %278, %249, %cst_54 {dimension_numbers = #tpu.dot_dimension_numbers<[1], [0], [0], [1], [0, 0, 1, 1], [], []>} : vector<8x128xbf16>, vector<128x384xbf16>, vector<8x384xf32> -> vector<8x384xf32>
    %280 = vector.broadcast %250 : vector<1x384xf32> to vector<8x384xf32>
    %281 = arith.addf %279, %280 : vector<8x384xf32>
    %282 = vector.extract_strided_slice %277 {offsets = [0, 0], sizes = [8, 256], strides = [1, 1]} : vector<8x384xf32> to vector<8x256xf32>
    %283 = vector.extract_strided_slice %281 {offsets = [0, 0], sizes = [8, 256], strides = [1, 1]} : vector<8x384xf32> to vector<8x256xf32>
    %284 = arith.addf %282, %283 : vector<8x256xf32>
    %285 = arith.negf %284 : vector<8x256xf32>
    %286 = math.exp %285 : vector<8x256xf32>
    %cst_55 = arith.constant 1.000000e+00 : f32
    %287 = vector.broadcast %cst_55 : f32 to vector<8x256xf32>
    %288 = arith.addf %287, %286 : vector<8x256xf32>
    %289 = arith.divf %287, %288 : vector<8x256xf32>
    %290 = vector.extract_strided_slice %289 {offsets = [0, 0], sizes = [8, 128], strides = [1, 1]} : vector<8x256xf32> to vector<8x128xf32>
    %291 = vector.extract_strided_slice %289 {offsets = [0, 128], sizes = [8, 128], strides = [1, 1]} : vector<8x256xf32> to vector<8x128xf32>
    %292 = vector.extract_strided_slice %277 {offsets = [0, 256], sizes = [8, 128], strides = [1, 1]} : vector<8x384xf32> to vector<8x128xf32>
    %293 = vector.extract_strided_slice %281 {offsets = [0, 256], sizes = [8, 128], strides = [1, 1]} : vector<8x384xf32> to vector<8x128xf32>
    %294 = arith.mulf %290, %293 : vector<8x128xf32>
    %295 = arith.addf %292, %294 : vector<8x128xf32>
    %296 = math.tanh %295 : vector<8x128xf32>
    %cst_56 = arith.constant 1.000000e+00 : f32
    %297 = vector.broadcast %cst_56 : f32 to vector<8x128xf32>
    %298 = arith.subf %297, %291 : vector<8x128xf32>
    %299 = arith.mulf %298, %296 : vector<8x128xf32>
    %300 = arith.mulf %291, %275 : vector<8x128xf32>
    %301 = arith.addf %299, %300 : vector<8x128xf32>
    %c8_57 = arith.constant 8 : index
    %c0_58 = arith.constant 0 : index
    %302 = vector.load %arg11[%c8_57, %c0_58] : memref<64x128xf32, #tpu.memory_space<vmem>>, vector<8x128xf32>
    tpu.vector_store %arg11[%c8_57, %c0_58], %301 {strides = array<i32>} : memref<64x128xf32, #tpu.memory_space<vmem>>, vector<8x128xf32>,
    %c16_59 = arith.constant 16 : index
    %c0_60 = arith.constant 0 : index
    %303 = vector.load %arg4[%c16_59, %c0_60] : memref<64x384xf32, #tpu.memory_space<vmem>>, vector<8x384xf32>
    %304 = arith.truncf %301 : vector<8x128xf32> to vector<8x128xbf16>
    %cst_61 = arith.constant dense<0.000000e+00> : vector<8x384xf32>
    %305 = tpu.matmul %304, %249, %cst_61 {dimension_numbers = #tpu.dot_dimension_numbers<[1], [0], [0], [1], [0, 0, 1, 1], [], []>} : vector<8x128xbf16>, vector<128x384xbf16>, vector<8x384xf32> -> vector<8x384xf32>
    %306 = vector.broadcast %250 : vector<1x384xf32> to vector<8x384xf32>
    %307 = arith.addf %305, %306 : vector<8x384xf32>
    %308 = vector.extract_strided_slice %303 {offsets = [0, 0], sizes = [8, 256], strides = [1, 1]} : vector<8x384xf32> to vector<8x256xf32>
    %309 = vector.extract_strided_slice %307 {offsets = [0, 0], sizes = [8, 256], strides = [1, 1]} : vector<8x384xf32> to vector<8x256xf32>
    %310 = arith.addf %308, %309 : vector<8x256xf32>
    %311 = arith.negf %310 : vector<8x256xf32>
    %312 = math.exp %311 : vector<8x256xf32>
    %cst_62 = arith.constant 1.000000e+00 : f32
    %313 = vector.broadcast %cst_62 : f32 to vector<8x256xf32>
    %314 = arith.addf %313, %312 : vector<8x256xf32>
    %315 = arith.divf %313, %314 : vector<8x256xf32>
    %316 = vector.extract_strided_slice %315 {offsets = [0, 0], sizes = [8, 128], strides = [1, 1]} : vector<8x256xf32> to vector<8x128xf32>
    %317 = vector.extract_strided_slice %315 {offsets = [0, 128], sizes = [8, 128], strides = [1, 1]} : vector<8x256xf32> to vector<8x128xf32>
    %318 = vector.extract_strided_slice %303 {offsets = [0, 256], sizes = [8, 128], strides = [1, 1]} : vector<8x384xf32> to vector<8x128xf32>
    %319 = vector.extract_strided_slice %307 {offsets = [0, 256], sizes = [8, 128], strides = [1, 1]} : vector<8x384xf32> to vector<8x128xf32>
    %320 = arith.mulf %316, %319 : vector<8x128xf32>
    %321 = arith.addf %318, %320 : vector<8x128xf32>
    %322 = math.tanh %321 : vector<8x128xf32>
    %cst_63 = arith.constant 1.000000e+00 : f32
    %323 = vector.broadcast %cst_63 : f32 to vector<8x128xf32>
    %324 = arith.subf %323, %317 : vector<8x128xf32>
    %325 = arith.mulf %324, %322 : vector<8x128xf32>
    %326 = arith.mulf %317, %301 : vector<8x128xf32>
    %327 = arith.addf %325, %326 : vector<8x128xf32>
    %c16_64 = arith.constant 16 : index
    %c0_65 = arith.constant 0 : index
    %328 = vector.load %arg11[%c16_64, %c0_65] : memref<64x128xf32, #tpu.memory_space<vmem>>, vector<8x128xf32>
    tpu.vector_store %arg11[%c16_64, %c0_65], %327 {strides = array<i32>} : memref<64x128xf32, #tpu.memory_space<vmem>>, vector<8x128xf32>,
    %c24_66 = arith.constant 24 : index
    %c0_67 = arith.constant 0 : index
    %329 = vector.load %arg4[%c24_66, %c0_67] : memref<64x384xf32, #tpu.memory_space<vmem>>, vector<8x384xf32>
    %330 = arith.truncf %327 : vector<8x128xf32> to vector<8x128xbf16>
    %cst_68 = arith.constant dense<0.000000e+00> : vector<8x384xf32>
    %331 = tpu.matmul %330, %249, %cst_68 {dimension_numbers = #tpu.dot_dimension_numbers<[1], [0], [0], [1], [0, 0, 1, 1], [], []>} : vector<8x128xbf16>, vector<128x384xbf16>, vector<8x384xf32> -> vector<8x384xf32>
    %332 = vector.broadcast %250 : vector<1x384xf32> to vector<8x384xf32>
    %333 = arith.addf %331, %332 : vector<8x384xf32>
    %334 = vector.extract_strided_slice %329 {offsets = [0, 0], sizes = [8, 256], strides = [1, 1]} : vector<8x384xf32> to vector<8x256xf32>
    %335 = vector.extract_strided_slice %333 {offsets = [0, 0], sizes = [8, 256], strides = [1, 1]} : vector<8x384xf32> to vector<8x256xf32>
    %336 = arith.addf %334, %335 : vector<8x256xf32>
    %337 = arith.negf %336 : vector<8x256xf32>
    %338 = math.exp %337 : vector<8x256xf32>
    %cst_69 = arith.constant 1.000000e+00 : f32
    %339 = vector.broadcast %cst_69 : f32 to vector<8x256xf32>
    %340 = arith.addf %339, %338 : vector<8x256xf32>
    %341 = arith.divf %339, %340 : vector<8x256xf32>
    %342 = vector.extract_strided_slice %341 {offsets = [0, 0], sizes = [8, 128], strides = [1, 1]} : vector<8x256xf32> to vector<8x128xf32>
    %343 = vector.extract_strided_slice %341 {offsets = [0, 128], sizes = [8, 128], strides = [1, 1]} : vector<8x256xf32> to vector<8x128xf32>
    %344 = vector.extract_strided_slice %329 {offsets = [0, 256], sizes = [8, 128], strides = [1, 1]} : vector<8x384xf32> to vector<8x128xf32>
    %345 = vector.extract_strided_slice %333 {offsets = [0, 256], sizes = [8, 128], strides = [1, 1]} : vector<8x384xf32> to vector<8x128xf32>
    %346 = arith.mulf %342, %345 : vector<8x128xf32>
    %347 = arith.addf %344, %346 : vector<8x128xf32>
    %348 = math.tanh %347 : vector<8x128xf32>
    %cst_70 = arith.constant 1.000000e+00 : f32
    %349 = vector.broadcast %cst_70 : f32 to vector<8x128xf32>
    %350 = arith.subf %349, %343 : vector<8x128xf32>
    %351 = arith.mulf %350, %348 : vector<8x128xf32>
    %352 = arith.mulf %343, %327 : vector<8x128xf32>
    %353 = arith.addf %351, %352 : vector<8x128xf32>
    %c24_71 = arith.constant 24 : index
    %c0_72 = arith.constant 0 : index
    %354 = vector.load %arg11[%c24_71, %c0_72] : memref<64x128xf32, #tpu.memory_space<vmem>>, vector<8x128xf32>
    tpu.vector_store %arg11[%c24_71, %c0_72], %353 {strides = array<i32>} : memref<64x128xf32, #tpu.memory_space<vmem>>, vector<8x128xf32>,
    %c32_73 = arith.constant 32 : index
    %c0_74 = arith.constant 0 : index
    %355 = vector.load %arg4[%c32_73, %c0_74] : memref<64x384xf32, #tpu.memory_space<vmem>>, vector<8x384xf32>
    %356 = arith.truncf %353 : vector<8x128xf32> to vector<8x128xbf16>
    %cst_75 = arith.constant dense<0.000000e+00> : vector<8x384xf32>
    %357 = tpu.matmul %356, %249, %cst_75 {dimension_numbers = #tpu.dot_dimension_numbers<[1], [0], [0], [1], [0, 0, 1, 1], [], []>} : vector<8x128xbf16>, vector<128x384xbf16>, vector<8x384xf32> -> vector<8x384xf32>
    %358 = vector.broadcast %250 : vector<1x384xf32> to vector<8x384xf32>
    %359 = arith.addf %357, %358 : vector<8x384xf32>
    %360 = vector.extract_strided_slice %355 {offsets = [0, 0], sizes = [8, 256], strides = [1, 1]} : vector<8x384xf32> to vector<8x256xf32>
    %361 = vector.extract_strided_slice %359 {offsets = [0, 0], sizes = [8, 256], strides = [1, 1]} : vector<8x384xf32> to vector<8x256xf32>
    %362 = arith.addf %360, %361 : vector<8x256xf32>
    %363 = arith.negf %362 : vector<8x256xf32>
    %364 = math.exp %363 : vector<8x256xf32>
    %cst_76 = arith.constant 1.000000e+00 : f32
    %365 = vector.broadcast %cst_76 : f32 to vector<8x256xf32>
    %366 = arith.addf %365, %364 : vector<8x256xf32>
    %367 = arith.divf %365, %366 : vector<8x256xf32>
    %368 = vector.extract_strided_slice %367 {offsets = [0, 0], sizes = [8, 128], strides = [1, 1]} : vector<8x256xf32> to vector<8x128xf32>
    %369 = vector.extract_strided_slice %367 {offsets = [0, 128], sizes = [8, 128], strides = [1, 1]} : vector<8x256xf32> to vector<8x128xf32>
    %370 = vector.extract_strided_slice %355 {offsets = [0, 256], sizes = [8, 128], strides = [1, 1]} : vector<8x384xf32> to vector<8x128xf32>
    %371 = vector.extract_strided_slice %359 {offsets = [0, 256], sizes = [8, 128], strides = [1, 1]} : vector<8x384xf32> to vector<8x128xf32>
    %372 = arith.mulf %368, %371 : vector<8x128xf32>
    %373 = arith.addf %370, %372 : vector<8x128xf32>
    %374 = math.tanh %373 : vector<8x128xf32>
    %cst_77 = arith.constant 1.000000e+00 : f32
    %375 = vector.broadcast %cst_77 : f32 to vector<8x128xf32>
    %376 = arith.subf %375, %369 : vector<8x128xf32>
    %377 = arith.mulf %376, %374 : vector<8x128xf32>
    %378 = arith.mulf %369, %353 : vector<8x128xf32>
    %379 = arith.addf %377, %378 : vector<8x128xf32>
    %c32_78 = arith.constant 32 : index
    %c0_79 = arith.constant 0 : index
    %380 = vector.load %arg11[%c32_78, %c0_79] : memref<64x128xf32, #tpu.memory_space<vmem>>, vector<8x128xf32>
    tpu.vector_store %arg11[%c32_78, %c0_79], %379 {strides = array<i32>} : memref<64x128xf32, #tpu.memory_space<vmem>>, vector<8x128xf32>,
    %c40_80 = arith.constant 40 : index
    %c0_81 = arith.constant 0 : index
    %381 = vector.load %arg4[%c40_80, %c0_81] : memref<64x384xf32, #tpu.memory_space<vmem>>, vector<8x384xf32>
    %382 = arith.truncf %379 : vector<8x128xf32> to vector<8x128xbf16>
    %cst_82 = arith.constant dense<0.000000e+00> : vector<8x384xf32>
    %383 = tpu.matmul %382, %249, %cst_82 {dimension_numbers = #tpu.dot_dimension_numbers<[1], [0], [0], [1], [0, 0, 1, 1], [], []>} : vector<8x128xbf16>, vector<128x384xbf16>, vector<8x384xf32> -> vector<8x384xf32>
    %384 = vector.broadcast %250 : vector<1x384xf32> to vector<8x384xf32>
    %385 = arith.addf %383, %384 : vector<8x384xf32>
    %386 = vector.extract_strided_slice %381 {offsets = [0, 0], sizes = [8, 256], strides = [1, 1]} : vector<8x384xf32> to vector<8x256xf32>
    %387 = vector.extract_strided_slice %385 {offsets = [0, 0], sizes = [8, 256], strides = [1, 1]} : vector<8x384xf32> to vector<8x256xf32>
    %388 = arith.addf %386, %387 : vector<8x256xf32>
    %389 = arith.negf %388 : vector<8x256xf32>
    %390 = math.exp %389 : vector<8x256xf32>
    %cst_83 = arith.constant 1.000000e+00 : f32
    %391 = vector.broadcast %cst_83 : f32 to vector<8x256xf32>
    %392 = arith.addf %391, %390 : vector<8x256xf32>
    %393 = arith.divf %391, %392 : vector<8x256xf32>
    %394 = vector.extract_strided_slice %393 {offsets = [0, 0], sizes = [8, 128], strides = [1, 1]} : vector<8x256xf32> to vector<8x128xf32>
    %395 = vector.extract_strided_slice %393 {offsets = [0, 128], sizes = [8, 128], strides = [1, 1]} : vector<8x256xf32> to vector<8x128xf32>
    %396 = vector.extract_strided_slice %381 {offsets = [0, 256], sizes = [8, 128], strides = [1, 1]} : vector<8x384xf32> to vector<8x128xf32>
    %397 = vector.extract_strided_slice %385 {offsets = [0, 256], sizes = [8, 128], strides = [1, 1]} : vector<8x384xf32> to vector<8x128xf32>
    %398 = arith.mulf %394, %397 : vector<8x128xf32>
    %399 = arith.addf %396, %398 : vector<8x128xf32>
    %400 = math.tanh %399 : vector<8x128xf32>
    %cst_84 = arith.constant 1.000000e+00 : f32
    %401 = vector.broadcast %cst_84 : f32 to vector<8x128xf32>
    %402 = arith.subf %401, %395 : vector<8x128xf32>
    %403 = arith.mulf %402, %400 : vector<8x128xf32>
    %404 = arith.mulf %395, %379 : vector<8x128xf32>
    %405 = arith.addf %403, %404 : vector<8x128xf32>
    %c40_85 = arith.constant 40 : index
    %c0_86 = arith.constant 0 : index
    %406 = vector.load %arg11[%c40_85, %c0_86] : memref<64x128xf32, #tpu.memory_space<vmem>>, vector<8x128xf32>
    tpu.vector_store %arg11[%c40_85, %c0_86], %405 {strides = array<i32>} : memref<64x128xf32, #tpu.memory_space<vmem>>, vector<8x128xf32>,
    %c48_87 = arith.constant 48 : index
    %c0_88 = arith.constant 0 : index
    %407 = vector.load %arg4[%c48_87, %c0_88] : memref<64x384xf32, #tpu.memory_space<vmem>>, vector<8x384xf32>
    %408 = arith.truncf %405 : vector<8x128xf32> to vector<8x128xbf16>
    %cst_89 = arith.constant dense<0.000000e+00> : vector<8x384xf32>
    %409 = tpu.matmul %408, %249, %cst_89 {dimension_numbers = #tpu.dot_dimension_numbers<[1], [0], [0], [1], [0, 0, 1, 1], [], []>} : vector<8x128xbf16>, vector<128x384xbf16>, vector<8x384xf32> -> vector<8x384xf32>
    %410 = vector.broadcast %250 : vector<1x384xf32> to vector<8x384xf32>
    %411 = arith.addf %409, %410 : vector<8x384xf32>
    %412 = vector.extract_strided_slice %407 {offsets = [0, 0], sizes = [8, 256], strides = [1, 1]} : vector<8x384xf32> to vector<8x256xf32>
    %413 = vector.extract_strided_slice %411 {offsets = [0, 0], sizes = [8, 256], strides = [1, 1]} : vector<8x384xf32> to vector<8x256xf32>
    %414 = arith.addf %412, %413 : vector<8x256xf32>
    %415 = arith.negf %414 : vector<8x256xf32>
    %416 = math.exp %415 : vector<8x256xf32>
    %cst_90 = arith.constant 1.000000e+00 : f32
    %417 = vector.broadcast %cst_90 : f32 to vector<8x256xf32>
    %418 = arith.addf %417, %416 : vector<8x256xf32>
    %419 = arith.divf %417, %418 : vector<8x256xf32>
    %420 = vector.extract_strided_slice %419 {offsets = [0, 0], sizes = [8, 128], strides = [1, 1]} : vector<8x256xf32> to vector<8x128xf32>
    %421 = vector.extract_strided_slice %419 {offsets = [0, 128], sizes = [8, 128], strides = [1, 1]} : vector<8x256xf32> to vector<8x128xf32>
    %422 = vector.extract_strided_slice %407 {offsets = [0, 256], sizes = [8, 128], strides = [1, 1]} : vector<8x384xf32> to vector<8x128xf32>
    %423 = vector.extract_strided_slice %411 {offsets = [0, 256], sizes = [8, 128], strides = [1, 1]} : vector<8x384xf32> to vector<8x128xf32>
    %424 = arith.mulf %420, %423 : vector<8x128xf32>
    %425 = arith.addf %422, %424 : vector<8x128xf32>
    %426 = math.tanh %425 : vector<8x128xf32>
    %cst_91 = arith.constant 1.000000e+00 : f32
    %427 = vector.broadcast %cst_91 : f32 to vector<8x128xf32>
    %428 = arith.subf %427, %421 : vector<8x128xf32>
    %429 = arith.mulf %428, %426 : vector<8x128xf32>
    %430 = arith.mulf %421, %405 : vector<8x128xf32>
    %431 = arith.addf %429, %430 : vector<8x128xf32>
    %c48_92 = arith.constant 48 : index
    %c0_93 = arith.constant 0 : index
    %432 = vector.load %arg11[%c48_92, %c0_93] : memref<64x128xf32, #tpu.memory_space<vmem>>, vector<8x128xf32>
    tpu.vector_store %arg11[%c48_92, %c0_93], %431 {strides = array<i32>} : memref<64x128xf32, #tpu.memory_space<vmem>>, vector<8x128xf32>,
    %c56_94 = arith.constant 56 : index
    %c0_95 = arith.constant 0 : index
    %433 = vector.load %arg4[%c56_94, %c0_95] : memref<64x384xf32, #tpu.memory_space<vmem>>, vector<8x384xf32>
    %434 = arith.truncf %431 : vector<8x128xf32> to vector<8x128xbf16>
    %cst_96 = arith.constant dense<0.000000e+00> : vector<8x384xf32>
    %435 = tpu.matmul %434, %249, %cst_96 {dimension_numbers = #tpu.dot_dimension_numbers<[1], [0], [0], [1], [0, 0, 1, 1], [], []>} : vector<8x128xbf16>, vector<128x384xbf16>, vector<8x384xf32> -> vector<8x384xf32>
    %436 = vector.broadcast %250 : vector<1x384xf32> to vector<8x384xf32>
    %437 = arith.addf %435, %436 : vector<8x384xf32>
    %438 = vector.extract_strided_slice %433 {offsets = [0, 0], sizes = [8, 256], strides = [1, 1]} : vector<8x384xf32> to vector<8x256xf32>
    %439 = vector.extract_strided_slice %437 {offsets = [0, 0], sizes = [8, 256], strides = [1, 1]} : vector<8x384xf32> to vector<8x256xf32>
    %440 = arith.addf %438, %439 : vector<8x256xf32>
    %441 = arith.negf %440 : vector<8x256xf32>
    %442 = math.exp %441 : vector<8x256xf32>
    %cst_97 = arith.constant 1.000000e+00 : f32
    %443 = vector.broadcast %cst_97 : f32 to vector<8x256xf32>
    %444 = arith.addf %443, %442 : vector<8x256xf32>
    %445 = arith.divf %443, %444 : vector<8x256xf32>
    %446 = vector.extract_strided_slice %445 {offsets = [0, 0], sizes = [8, 128], strides = [1, 1]} : vector<8x256xf32> to vector<8x128xf32>
    %447 = vector.extract_strided_slice %445 {offsets = [0, 128], sizes = [8, 128], strides = [1, 1]} : vector<8x256xf32> to vector<8x128xf32>
    %448 = vector.extract_strided_slice %433 {offsets = [0, 256], sizes = [8, 128], strides = [1, 1]} : vector<8x384xf32> to vector<8x128xf32>
    %449 = vector.extract_strided_slice %437 {offsets = [0, 256], sizes = [8, 128], strides = [1, 1]} : vector<8x384xf32> to vector<8x128xf32>
    %450 = arith.mulf %446, %449 : vector<8x128xf32>
    %451 = arith.addf %448, %450 : vector<8x128xf32>
    %452 = math.tanh %451 : vector<8x128xf32>
    %cst_98 = arith.constant 1.000000e+00 : f32
    %453 = vector.broadcast %cst_98 : f32 to vector<8x128xf32>
    %454 = arith.subf %453, %447 : vector<8x128xf32>
    %455 = arith.mulf %454, %452 : vector<8x128xf32>
    %456 = arith.mulf %447, %431 : vector<8x128xf32>
    %457 = arith.addf %455, %456 : vector<8x128xf32>
    %c56_99 = arith.constant 56 : index
    %c0_100 = arith.constant 0 : index
    %458 = vector.load %arg11[%c56_99, %c0_100] : memref<64x128xf32, #tpu.memory_space<vmem>>, vector<8x128xf32>
    tpu.vector_store %arg11[%c56_99, %c0_100], %457 {strides = array<i32>} : memref<64x128xf32, #tpu.memory_space<vmem>>, vector<8x128xf32>,
    %c0_101 = arith.constant 0 : index
    %c0_102 = arith.constant 0 : index
    %459 = vector.load %arg10[%c0_101, %c0_102] : memref<8x128xf32, #tpu.memory_space<vmem>>, vector<8x128xf32>
    tpu.vector_store %arg10[%c0_101, %c0_102], %457 {strides = array<i32>} : memref<8x128xf32, #tpu.memory_space<vmem>>, vector<8x128xf32>,
    %c0_103 = arith.constant 0 : index
    %c0_104 = arith.constant 0 : index
    %460 = vector.load %arg11[%c0_103, %c0_104] : memref<64x128xf32, #tpu.memory_space<vmem>>, vector<64x128xf32>
    %461 = arith.truncf %460 : vector<64x128xf32> to vector<64x128xbf16>
    %c0_105 = arith.constant 0 : index
    %c0_106 = arith.constant 0 : index
    %462 = vector.load %arg7[%c0_105, %c0_106] : memref<128x128xbf16, #tpu.memory_space<vmem>>, vector<128x128xbf16>
    %cst_107 = arith.constant dense<0.000000e+00> : vector<64x128xf32>
    %463 = tpu.matmul %461, %462, %cst_107 {dimension_numbers = #tpu.dot_dimension_numbers<[1], [0], [0], [1], [0, 0, 1, 1], [], []>} : vector<64x128xbf16>, vector<128x128xbf16>, vector<64x128xf32> -> vector<64x128xf32>
    %c0_108 = arith.constant 0 : index
    %c0_109 = arith.constant 0 : index
    %464 = vector.load %arg8[%c0_108, %c0_109] : memref<1x128xf32, #tpu.memory_space<vmem>>, vector<1x128xf32>
    %465 = vector.broadcast %464 : vector<1x128xf32> to vector<64x128xf32>
    %466 = arith.addf %463, %465 : vector<64x128xf32>
    %c0_110 = arith.constant 0 : index
    %c0_111 = arith.constant 0 : index
    %467 = vector.load %arg9[%c0_110, %c0_111] : memref<64x128xf32, #tpu.memory_space<vmem>>, vector<64x128xf32>
    tpu.vector_store %arg9[%c0_110, %c0_111], %466 {strides = array<i32>} : memref<64x128xf32, #tpu.memory_space<vmem>>, vector<64x128xf32>,
    return
  }
}

</mosaic_0001>

<llo_original>
// kernel: seq2seq_forward.1
$region0: #{seq2seq_forward.1}
  #allocation0 [shape = 'u32[]', space=smem, size = 0x4, offset = 0x4, fixed_abs, tag = 'smem constant byte address 0x4 - core index']
  #allocation1 [shape = 'u32[72,128]{1,0:T(1,128)}', space=vmem, size = 0x9000, scoped, tag = 'internal scratch']
  #allocation2 [shape = 'f32[64,128]{1,0:T(8,128)}', space=vmem, size = 0x8000, scoped, tag = 'scratch operand']
  %s0 = inlined_call_operand.vmem [shape: f32[64,384], index: 0, kind: input, shape index: {}]
  %s1 = inlined_call_operand.vmem [shape: s32[8,1], index: 1, kind: input, shape index: {}]
  %s2 = inlined_call_operand.vmem [shape: bf16[128,384], index: 2, kind: input, shape index: {}]
  %s3 = inlined_call_operand.vmem [shape: f32[1,384], index: 3, kind: input, shape index: {}]
  %s4 = inlined_call_operand.vmem [shape: f32[64,384], index: 4, kind: input, shape index: {}]
  %s5 = inlined_call_operand.vmem [shape: bf16[128,384], index: 5, kind: input, shape index: {}]
  %s6 = inlined_call_operand.vmem [shape: f32[1,384], index: 6, kind: input, shape index: {}]
  %s7 = inlined_call_operand.vmem [shape: bf16[128,128], index: 7, kind: input, shape index: {}]
  %s8 = inlined_call_operand.vmem [shape: f32[1,128], index: 8, kind: input, shape index: {}]
  %s9 = inlined_call_operand.hbm [shape: f32[64,128], index: 9, kind: output, shape index: {0}]
  %s10 = inlined_call_operand.hbm [shape: f32[8,128], index: 10, kind: output, shape index: {1}]
  %11 = xla_tuple %s9, %s10
  %s12 = sld [smem:[#allocation0]]
  $region54: #{seq2seq_forward.1} parent=0
    _
  %s14 = ssub.s32 1, %s12
  %s15 = scalar_select 0, %s14, %s12
  $region1: #{seq2seq_forward.1} parent=0
    #allocation3 [shape = 'u8[32768]{0}', space=vmem, size = 0x8000, scoped, tag = 'output window, operand 0, single buffered']
    #allocation4 [shape = 's32[1]{0}', space=sflag, size = 0x4, scoped, tag = 'scoped memory for seq2seq_forward.1']
    #allocation5 [shape = 'u8[4096]{0}', space=vmem, size = 0x1000, scoped, tag = 'output window, operand 1, single buffered']
    #allocation6 [shape = 's32[1]{0}', space=sflag, size = 0x4, scoped, tag = 'scoped memory for seq2seq_forward.1']
    %16 = vsyncpa [#allocation4], 0
    %17 = vsyncpa [#allocation6], 0
    // Predicated region
    $region2: #{seq2seq_forward.1} parent=1 // pred_check
      _
    $region3: #{seq2seq_forward.1} parent=1 // pred_check_branch
      %19 = sbr.rel (0) target = $region5
    $region4: #{seq2seq_forward.1} parent=1 // pred_region
      _
    $region5: #{seq2seq_forward.1} parent=1 // pred_fallthru
      _
    // Predicated region
    $region6: #{seq2seq_forward.1} parent=1 // pred_check
      _
    $region7: #{seq2seq_forward.1} parent=1 // pred_check_branch
      %21 = sbr.rel (0) target = $region9
    $region8: #{seq2seq_forward.1} parent=1 // pred_region
      _
    $region9: #{seq2seq_forward.1} parent=1 // pred_fallthru
      _
    // Predicated region
    $region10: #{seq2seq_forward.1} parent=1 // pred_check
      _
    $region11: #{seq2seq_forward.1} parent=1 // pred_check_branch
      %23 = sbr.rel (0) target = $region13
    $region12: #{seq2seq_forward.1} parent=1 // pred_region
      _
    $region13: #{seq2seq_forward.1} parent=1 // pred_fallthru
      _
    // Predicated region
    $region14: #{seq2seq_forward.1} parent=1 // pred_check
      _
    $region15: #{seq2seq_forward.1} parent=1 // pred_check_branch
      %25 = sbr.rel (0) target = $region17
    $region16: #{seq2seq_forward.1} parent=1 // pred_region
      _
    $region17: #{seq2seq_forward.1} parent=1 // pred_fallthru
      _
    // Predicated region
    $region18: #{seq2seq_forward.1} parent=1 // pred_check
      _
    $region19: #{seq2seq_forward.1} parent=1 // pred_check_branch
      %27 = sbr.rel (0) target = $region21
    $region20: #{seq2seq_forward.1} parent=1 // pred_region
      _
    $region21: #{seq2seq_forward.1} parent=1 // pred_fallthru
      _
    // Predicated region
    $region22: #{seq2seq_forward.1} parent=1 // pred_check
      _
    $region23: #{seq2seq_forward.1} parent=1 // pred_check_branch
      %29 = sbr.rel (0) target = $region25
    $region24: #{seq2seq_forward.1} parent=1 // pred_region
      _
    $region25: #{seq2seq_forward.1} parent=1 // pred_fallthru
      _
    // Predicated region
    $region26: #{seq2seq_forward.1} parent=1 // pred_check
      _
    $region27: #{seq2seq_forward.1} parent=1 // pred_check_branch
      %31 = sbr.rel (0) target = $region29
    $region28: #{seq2seq_forward.1} parent=1 // pred_region
      _
    $region29: #{seq2seq_forward.1} parent=1 // pred_fallthru
      _
    // Predicated region
    $region30: #{seq2seq_forward.1} parent=1 // pred_check
      _
    $region31: #{seq2seq_forward.1} parent=1 // pred_check_branch
      %33 = sbr.rel (0) target = $region33
    $region32: #{seq2seq_forward.1} parent=1 // pred_region
      _
    $region33: #{seq2seq_forward.1} parent=1 // pred_fallthru
      _
    // Predicated region
    $region34: #{seq2seq_forward.1} parent=1 // pred_check
      _
    $region35: #{seq2seq_forward.1} parent=1 // pred_check_branch
      %35 = sbr.rel (0) target = $region37
    $region36: #{seq2seq_forward.1} parent=1 // pred_region
      _
    $region37: #{seq2seq_forward.1} parent=1 // pred_fallthru
      _
    %v37 = vld [vmem:[%s2] sm:$0xff]
    %v38 = vld [vmem:[%s2 + $0x8] sm:$0xf]
    %v39 = vld [vmem:[%s2 + $0xc] sm:$0xff]
    %v40 = vld [vmem:[%s2 + $0x14] sm:$0xf]
    %v41 = vld [vmem:[%s2 + $0x18] sm:$0xff]
    %v42 = vld [vmem:[%s2 + $0x20] sm:$0xf]
    %v43 = vld [vmem:[%s2 + $0x24] sm:$0xff]
    %v44 = vld [vmem:[%s2 + $0x2c] sm:$0xf]
    %v45 = vld [vmem:[%s2 + $0x30] sm:$0xff]
    %v46 = vld [vmem:[%s2 + $0x38] sm:$0xf]
    %v47 = vld [vmem:[%s2 + $0x3c] sm:$0xff]
    %v48 = vld [vmem:[%s2 + $0x44] sm:$0xf]
    %v49 = vld [vmem:[%s2 + $0x48] sm:$0xff]
    %v50 = vld [vmem:[%s2 + $0x50] sm:$0xf]
    %v51 = vld [vmem:[%s2 + $0x54] sm:$0xff]
    %v52 = vld [vmem:[%s2 + $0x5c] sm:$0xf]
    %v53 = vld [vmem:[%s2 + $0x60] sm:$0xff]
    %v54 = vld [vmem:[%s2 + $0x68] sm:$0xf]
    %v55 = vld [vmem:[%s2 + $0x6c] sm:$0xff]
    %v56 = vld [vmem:[%s2 + $0x74] sm:$0xf]
    %v57 = vld [vmem:[%s2 + $0x78] sm:$0xff]
    %v58 = vld [vmem:[%s2 + $0x80] sm:$0xf]
    %v59 = vld [vmem:[%s2 + $0x84] sm:$0xff]
    %v60 = vld [vmem:[%s2 + $0x8c] sm:$0xf]
    %v61 = vld [vmem:[%s2 + $0x90] sm:$0xff]
    %v62 = vld [vmem:[%s2 + $0x98] sm:$0xf]
    %v63 = vld [vmem:[%s2 + $0x9c] sm:$0xff]
    %v64 = vld [vmem:[%s2 + $0xa4] sm:$0xf]
    %v65 = vld [vmem:[%s2 + $0xa8] sm:$0xff]
    %v66 = vld [vmem:[%s2 + $0xb0] sm:$0xf]
    %v67 = vld [vmem:[%s2 + $0xb4] sm:$0xff]
    %v68 = vld [vmem:[%s2 + $0xbc] sm:$0xf]
    %v69 = vld [vmem:[%s3] sm:$0x7]
    %v70 = vld [vmem:[%s1] sm:$0xff]
    %vm71 = vcmp.gt.s32.totalorder %v70, 1
    %v72 = vsel %vm71, %v70, 1
    %vm73 = vcmp.lt.s32.totalorder %v72, 8
    %v74 = vsel %vm73, %v72, 8
    %v75 = vld [vmem:[%s0] sm:$0xff]
    %v76 = vld [vmem:[%s0 + $0x8] sm:$0xff]
    %v77 = vld [vmem:[%s0 + $0x10] sm:$0xff]
    %v79 = vperm.slane %v69, 0
    %v80 = vperm.slane %v69, 1
    %v81 = vperm.slane %v69, 2
    %v117 = vunpack.c.l.b16 %v37
    %v118 = vunpack.c.h.b16 %v37
    %v119 = vunpack.c.l.b16 %v38
    %v120 = vunpack.c.l.b16 %v39
    %v121 = vunpack.c.h.b16 %v39
    %v122 = vunpack.c.l.b16 %v40
    %v123 = vunpack.c.l.b16 %v41
    %v124 = vunpack.c.h.b16 %v41
    %v125 = vunpack.c.l.b16 %v42
    %v126 = vunpack.c.l.b16 %v43
    %v127 = vunpack.c.h.b16 %v43
    %v128 = vunpack.c.l.b16 %v44
    %v129 = vunpack.c.l.b16 %v45
    %v130 = vunpack.c.h.b16 %v45
    %v131 = vunpack.c.l.b16 %v46
    %v132 = vunpack.c.l.b16 %v47
    %v133 = vunpack.c.h.b16 %v47
    %v134 = vunpack.c.l.b16 %v48
    %v135 = vunpack.c.l.b16 %v49
    %v136 = vunpack.c.h.b16 %v49
    %v137 = vunpack.c.l.b16 %v50
    %v138 = vunpack.c.l.b16 %v51
    %v139 = vunpack.c.h.b16 %v51
    %v140 = vunpack.c.l.b16 %v52
    %v141 = vunpack.c.l.b16 %v53
    %v142 = vunpack.c.h.b16 %v53
    %v143 = vunpack.c.l.b16 %v54
    %v144 = vunpack.c.l.b16 %v55
    %v145 = vunpack.c.h.b16 %v55
    %v146 = vunpack.c.l.b16 %v56
    %v147 = vunpack.c.l.b16 %v57
    %v148 = vunpack.c.h.b16 %v57
    %v149 = vunpack.c.l.b16 %v58
    %v150 = vunpack.c.l.b16 %v59
    %v151 = vunpack.c.h.b16 %v59
    %v152 = vunpack.c.l.b16 %v60
    %v153 = vunpack.c.l.b16 %v61
    %v154 = vunpack.c.h.b16 %v61
    %v155 = vunpack.c.l.b16 %v62
    %v156 = vunpack.c.l.b16 %v63
    %v157 = vunpack.c.h.b16 %v63
    %v158 = vunpack.c.l.b16 %v64
    %v159 = vunpack.c.l.b16 %v65
    %v160 = vunpack.c.h.b16 %v65
    %v161 = vunpack.c.l.b16 %v66
    %v162 = vunpack.c.l.b16 %v67
    %v163 = vunpack.c.h.b16 %v67
    %v164 = vunpack.c.l.b16 %v68
    %v165 = vpack.c.b16 %v120, %v117
    %v166 = vpack.c.b16 %v121, %v118
    %v167 = vpack.c.b16 %v122, %v119
    %v168 = vpack.c.b16 %v126, %v123
    %v169 = vpack.c.b16 %v127, %v124
    %v170 = vpack.c.b16 %v128, %v125
    %v171 = vpack.c.b16 %v132, %v129
    %v172 = vpack.c.b16 %v133, %v130
    %v173 = vpack.c.b16 %v134, %v131
    %v174 = vpack.c.b16 %v138, %v135
    %v175 = vpack.c.b16 %v139, %v136
    %v176 = vpack.c.b16 %v140, %v137
    %v177 = vpack.c.b16 %v144, %v141
    %v178 = vpack.c.b16 %v145, %v142
    %v179 = vpack.c.b16 %v146, %v143
    %v180 = vpack.c.b16 %v150, %v147
    %v181 = vpack.c.b16 %v151, %v148
    %v182 = vpack.c.b16 %v152, %v149
    %v183 = vpack.c.b16 %v156, %v153
    %v184 = vpack.c.b16 %v157, %v154
    %v185 = vpack.c.b16 %v158, %v155
    %v186 = vpack.c.b16 %v162, %v159
    %v187 = vpack.c.b16 %v163, %v160
    %v188 = vpack.c.b16 %v164, %v161
    %213 = vmatpush.bf16.msra.mxu0 %v186
    %214 = vmatpush.bf16.msra.mxu0 %v183
    %215 = vmatpush.bf16.msra.mxu0 %v180
    %216 = vmatpush.bf16.msra.mxu0 %v177
    %217 = vmatpush.bf16.msra.mxu0 %v174
    %218 = vmatpush.bf16.msra.mxu0 %v171
    %219 = vmatpush.bf16.msra.mxu0 %v168
    %220 = vmatpush.bf16.msra.mxu0 %v165
    %221 = vmatmul.bf16.gmra.mxu0 0
    %v222 = vpop.f32.mrf.mxu0
    %v223 = vadd.f32 %v79, %v222
    %v224 = vpop.f32.mrf.mxu0
    %225 = vdwg.mxu0
    %226 = vmatpush.bf16.msra.mxu0 %v187
    %227 = vmatpush.bf16.msra.mxu0 %v184
    %228 = vmatpush.bf16.msra.mxu0 %v181
    %229 = vmatpush.bf16.msra.mxu0 %v178
    %230 = vmatpush.bf16.msra.mxu0 %v175
    %231 = vmatpush.bf16.msra.mxu0 %v172
    %232 = vmatpush.bf16.msra.mxu0 %v169
    %233 = vmatpush.bf16.msra.mxu0 %v166
    %234 = vmatmul.bf16.gmra.mxu0 0
    %v235 = vpop.f32.mrf.mxu0
    %v236 = vadd.f32 %v80, %v235
    %v237 = vpop.f32.mrf.mxu0
    %238 = vdwg.mxu0
    %239 = vmatpush.bf16.msra.mxu0 %v188
    %240 = vmatpush.bf16.msra.mxu0 %v185
    %241 = vmatpush.bf16.msra.mxu0 %v182
    %242 = vmatpush.bf16.msra.mxu0 %v179
    %243 = vmatpush.bf16.msra.mxu0 %v176
    %244 = vmatpush.bf16.msra.mxu0 %v173
    %245 = vmatpush.bf16.msra.mxu0 %v170
    %246 = vmatpush.bf16.msra.mxu0 %v167
    %247 = vmatmul.bf16.gmra.mxu0 0
    %v248 = vpop.f32.mrf.mxu0
    %v249 = vadd.f32 %v81, %v248
    %v250 = vpop.f32.mrf.mxu0
    %251 = vdwg.mxu0
    %v252 = vadd.f32 %v75, %v223
    %v253 = vadd.f32 %v76, %v236
    %v254 = vxor.u32 %v252, 2147483648
    %v255 = vxor.u32 %v253, 2147483648
    %v256 = vmul.f32 %v254, 1.442695
    %v257 = vpow.pop %v256
    %v258 = vmul.f32 %v255, 1.442695
    %v259 = vpow.pop %v258
    %v260 = vadd.f32 %v257, 1.0
    %v261 = vadd.f32 %v259, 1.0
    %v262 = vrcp.pop %v260
    %v263 = vmul.f32 %v260, %v262
    %v264 = vsub.f32 1.0, %v263
    %v265 = vmul.f32 %v262, %v264
    %v266 = vadd.f32 %v262, %v265
    %vm267 = vweird.f32 %v260
    %vm268 = vweird.f32 %v262
    %vm269 = vmor %vm267, %vm268
    %v270 = vsel %vm269, %v262, %v266
    %v271 = vand.u32 2147483647, %v260
    %vm272 = vcmp.eq.f32.partialorder %v271, 8.507059e+37
    %v273 = vand.u32 %v260, 2147483648
    %v274 = vor.u32 1.1754944e-38, %v273
    %v275 = vsel %vm272, %v274, %v270
    %v276 = vmul.f32 1.0, %v275
    %v277 = vrcp.pop %v261
    %v278 = vmul.f32 %v261, %v277
    %v279 = vsub.f32 1.0, %v278
    %v280 = vmul.f32 %v277, %v279
    %v281 = vadd.f32 %v277, %v280
    %vm282 = vweird.f32 %v261
    %vm283 = vweird.f32 %v277
    %vm284 = vmor %vm282, %vm283
    %v285 = vsel %vm284, %v277, %v281
    %v286 = vand.u32 2147483647, %v261
    %vm287 = vcmp.eq.f32.partialorder %v286, 8.507059e+37
    %v288 = vand.u32 %v261, 2147483648
    %v289 = vor.u32 1.1754944e-38, %v288
    %v290 = vsel %vm287, %v289, %v285
    %v291 = vmul.f32 1.0, %v290
    %v292 = vmul.f32 %v276, %v249
    %v293 = vadd.f32 %v77, %v292
    %v294 = vtanh.pop %v293
    %v295 = vsub.f32 1.0, %v291
    %v296 = vmul.f32 %v295, %v294
    %v297 = vmul.f32 %v291, 0.0
    %v298 = vadd.f32 %v296, %v297
    %vm299 = vcmp.eq.s32.totalorder %v74, 1
    %v300 = vsel %vm299, 1, 0
    %301 = vset.pattern.permute.xlu0 0
    %302 = vperm.xlu0 %301, %v300
    %v303 = vpop.permute.xlu0 %302
    %vm304 = vcmp.eq.s32.totalorder %v303, 1
    %v305 = vsel %vm304, %v298, 0.0
    %v306 = vld [vmem:[%s0 + $0x18] sm:$0xff]
    %v307 = vld [vmem:[%s0 + $0x20] sm:$0xff]
    %v308 = vld [vmem:[%s0 + $0x28] sm:$0xff]
    %v309 = vpack.c.bf16 %v298, %v298
    %310 = vmatpush.bf16.msra.mxu0 %v186
    %311 = vmatpush.bf16.msra.mxu0 %v183
    %312 = vmatpush.bf16.msra.mxu0 %v180
    %313 = vmatpush.bf16.msra.mxu0 %v177
    %314 = vmatpush.bf16.msra.mxu0 %v174
    %315 = vmatpush.bf16.msra.mxu0 %v171
    %316 = vmatpush.bf16.msra.mxu0 %v168
    %317 = vmatpush.bf16.msra.mxu0 %v165
    %318 = vmatmul.bf16.gmra.mxu0 %v309
    %v319 = vpop.f32.mrf.mxu0
    %v320 = vadd.f32 %v79, %v319
    %v321 = vpop.f32.mrf.mxu0
    %322 = vdwg.mxu0
    %323 = vmatpush.bf16.msra.mxu0 %v187
    %324 = vmatpush.bf16.msra.mxu0 %v184
    %325 = vmatpush.bf16.msra.mxu0 %v181
    %326 = vmatpush.bf16.msra.mxu0 %v178
    %327 = vmatpush.bf16.msra.mxu0 %v175
    %328 = vmatpush.bf16.msra.mxu0 %v172
    %329 = vmatpush.bf16.msra.mxu0 %v169
    %330 = vmatpush.bf16.msra.mxu0 %v166
    %331 = vmatmul.bf16.gmra.mxu0 %v309
    %v332 = vpop.f32.mrf.mxu0
    %v333 = vadd.f32 %v80, %v332
    %v334 = vpop.f32.mrf.mxu0
    %335 = vdwg.mxu0
    %336 = vmatpush.bf16.msra.mxu0 %v188
    %337 = vmatpush.bf16.msra.mxu0 %v185
    %338 = vmatpush.bf16.msra.mxu0 %v182
    %339 = vmatpush.bf16.msra.mxu0 %v179
    %340 = vmatpush.bf16.msra.mxu0 %v176
    %341 = vmatpush.bf16.msra.mxu0 %v173
    %342 = vmatpush.bf16.msra.mxu0 %v170
    %343 = vmatpush.bf16.msra.mxu0 %v167
    %344 = vmatmul.bf16.gmra.mxu0 %v309
    %v345 = vpop.f32.mrf.mxu0
    %v346 = vadd.f32 %v81, %v345
    %v347 = vpop.f32.mrf.mxu0
    %348 = vdwg.mxu0
    %v349 = vadd.f32 %v306, %v320
    %v350 = vadd.f32 %v307, %v333
    %v351 = vxor.u32 %v349, 2147483648
    %v352 = vxor.u32 %v350, 2147483648
    %v353 = vmul.f32 %v351, 1.442695
    %v354 = vpow.pop %v353
    %v355 = vmul.f32 %v352, 1.442695
    %v356 = vpow.pop %v355
    %v357 = vadd.f32 %v354, 1.0
    %v358 = vadd.f32 %v356, 1.0
    %v359 = vrcp.pop %v357
    %v360 = vmul.f32 %v357, %v359
    %v361 = vsub.f32 1.0, %v360
    %v362 = vmul.f32 %v359, %v361
    %v363 = vadd.f32 %v359, %v362
    %vm364 = vweird.f32 %v357
    %vm365 = vweird.f32 %v359
    %vm366 = vmor %vm364, %vm365
    %v367 = vsel %vm366, %v359, %v363
    %v368 = vand.u32 2147483647, %v357
    %vm369 = vcmp.eq.f32.partialorder %v368, 8.507059e+37
    %v370 = vand.u32 %v357, 2147483648
    %v371 = vor.u32 1.1754944e-38, %v370
    %v372 = vsel %vm369, %v371, %v367
    %v373 = vmul.f32 1.0, %v372
    %v374 = vrcp.pop %v358
    %v375 = vmul.f32 %v358, %v374
    %v376 = vsub.f32 1.0, %v375
    %v377 = vmul.f32 %v374, %v376
    %v378 = vadd.f32 %v374, %v377
    %vm379 = vweird.f32 %v358
    %vm380 = vweird.f32 %v374
    %vm381 = vmor %vm379, %vm380
    %v382 = vsel %vm381, %v374, %v378
    %v383 = vand.u32 2147483647, %v358
    %vm384 = vcmp.eq.f32.partialorder %v383, 8.507059e+37
    %v385 = vand.u32 %v358, 2147483648
    %v386 = vor.u32 1.1754944e-38, %v385
    %v387 = vsel %vm384, %v386, %v382
    %v388 = vmul.f32 1.0, %v387
    %v389 = vmul.f32 %v373, %v346
    %v390 = vadd.f32 %v308, %v389
    %v391 = vtanh.pop %v390
    %v392 = vsub.f32 1.0, %v388
    %v393 = vmul.f32 %v392, %v391
    %v394 = vmul.f32 %v388, %v298
    %v395 = vadd.f32 %v393, %v394
    %vm396 = vcmp.eq.s32.totalorder %v74, 2
    %v397 = vsel %vm396, 1, 0
    %398 = vset.pattern.permute.xlu0 0
    %399 = vperm.xlu0 %398, %v397
    %v400 = vpop.permute.xlu0 %399
    %vm401 = vcmp.eq.s32.totalorder %v400, 1
    %v402 = vsel %vm401, %v395, %v305
    %v403 = vld [vmem:[%s0 + $0x30] sm:$0xff]
    %v404 = vld [vmem:[%s0 + $0x38] sm:$0xff]
    %v405 = vld [vmem:[%s0 + $0x40] sm:$0xff]
    %v406 = vpack.c.bf16 %v395, %v395
    %407 = vmatpush.bf16.msra.mxu0 %v186
    %408 = vmatpush.bf16.msra.mxu0 %v183
    %409 = vmatpush.bf16.msra.mxu0 %v180
    %410 = vmatpush.bf16.msra.mxu0 %v177
    %411 = vmatpush.bf16.msra.mxu0 %v174
    %412 = vmatpush.bf16.msra.mxu0 %v171
    %413 = vmatpush.bf16.msra.mxu0 %v168
    %414 = vmatpush.bf16.msra.mxu0 %v165
    %415 = vmatmul.bf16.gmra.mxu0 %v406
    %v416 = vpop.f32.mrf.mxu0
    %v417 = vadd.f32 %v79, %v416
    %v418 = vpop.f32.mrf.mxu0
    %419 = vdwg.mxu0
    %420 = vmatpush.bf16.msra.mxu0 %v187
    %421 = vmatpush.bf16.msra.mxu0 %v184
    %422 = vmatpush.bf16.msra.mxu0 %v181
    %423 = vmatpush.bf16.msra.mxu0 %v178
    %424 = vmatpush.bf16.msra.mxu0 %v175
    %425 = vmatpush.bf16.msra.mxu0 %v172
    %426 = vmatpush.bf16.msra.mxu0 %v169
    %427 = vmatpush.bf16.msra.mxu0 %v166
    %428 = vmatmul.bf16.gmra.mxu0 %v406
    %v429 = vpop.f32.mrf.mxu0
    %v430 = vadd.f32 %v80, %v429
    %v431 = vpop.f32.mrf.mxu0
    %432 = vdwg.mxu0
    %433 = vmatpush.bf16.msra.mxu0 %v188
    %434 = vmatpush.bf16.msra.mxu0 %v185
    %435 = vmatpush.bf16.msra.mxu0 %v182
    %436 = vmatpush.bf16.msra.mxu0 %v179
    %437 = vmatpush.bf16.msra.mxu0 %v176
    %438 = vmatpush.bf16.msra.mxu0 %v173
    %439 = vmatpush.bf16.msra.mxu0 %v170
    %440 = vmatpush.bf16.msra.mxu0 %v167
    %441 = vmatmul.bf16.gmra.mxu0 %v406
    %v442 = vpop.f32.mrf.mxu0
    %v443 = vadd.f32 %v81, %v442
    %v444 = vpop.f32.mrf.mxu0
    %445 = vdwg.mxu0
    %v446 = vadd.f32 %v403, %v417
    %v447 = vadd.f32 %v404, %v430
    %v448 = vxor.u32 %v446, 2147483648
    %v449 = vxor.u32 %v447, 2147483648
    %v450 = vmul.f32 %v448, 1.442695
    %v451 = vpow.pop %v450
    %v452 = vmul.f32 %v449, 1.442695
    %v453 = vpow.pop %v452
    %v454 = vadd.f32 %v451, 1.0
    %v455 = vadd.f32 %v453, 1.0
    %v456 = vrcp.pop %v454
    %v457 = vmul.f32 %v454, %v456
    %v458 = vsub.f32 1.0, %v457
    %v459 = vmul.f32 %v456, %v458
    %v460 = vadd.f32 %v456, %v459
    %vm461 = vweird.f32 %v454
    %vm462 = vweird.f32 %v456
    %vm463 = vmor %vm461, %vm462
    %v464 = vsel %vm463, %v456, %v460
    %v465 = vand.u32 2147483647, %v454
    %vm466 = vcmp.eq.f32.partialorder %v465, 8.507059e+37
    %v467 = vand.u32 %v454, 2147483648
    %v468 = vor.u32 1.1754944e-38, %v467
    %v469 = vsel %vm466, %v468, %v464
    %v470 = vmul.f32 1.0, %v469
    %v471 = vrcp.pop %v455
    %v472 = vmul.f32 %v455, %v471
    %v473 = vsub.f32 1.0, %v472
    %v474 = vmul.f32 %v471, %v473
    %v475 = vadd.f32 %v471, %v474
    %vm476 = vweird.f32 %v455
    %vm477 = vweird.f32 %v471
    %vm478 = vmor %vm476, %vm477
    %v479 = vsel %vm478, %v471, %v475
    %v480 = vand.u32 2147483647, %v455
    %vm481 = vcmp.eq.f32.partialorder %v480, 8.507059e+37
    %v482 = vand.u32 %v455, 2147483648
    %v483 = vor.u32 1.1754944e-38, %v482
    %v484 = vsel %vm481, %v483, %v479
    %v485 = vmul.f32 1.0, %v484
    %v486 = vmul.f32 %v470, %v443
    %v487 = vadd.f32 %v405, %v486
    %v488 = vtanh.pop %v487
    %v489 = vsub.f32 1.0, %v485
    %v490 = vmul.f32 %v489, %v488
    %v491 = vmul.f32 %v485, %v395
    %v492 = vadd.f32 %v490, %v491
    %vm493 = vcmp.eq.s32.totalorder %v74, 3
    %v494 = vsel %vm493, 1, 0
    %495 = vset.pattern.permute.xlu0 0
    %496 = vperm.xlu0 %495, %v494
    %v497 = vpop.permute.xlu0 %496
    %vm498 = vcmp.eq.s32.totalorder %v497, 1
    %v499 = vsel %vm498, %v492, %v402
    %v500 = vld [vmem:[%s0 + $0x48] sm:$0xff]
    %v501 = vld [vmem:[%s0 + $0x50] sm:$0xff]
    %v502 = vld [vmem:[%s0 + $0x58] sm:$0xff]
    %v503 = vpack.c.bf16 %v492, %v492
    %504 = vmatpush.bf16.msra.mxu0 %v186
    %505 = vmatpush.bf16.msra.mxu0 %v183
    %506 = vmatpush.bf16.msra.mxu0 %v180
    %507 = vmatpush.bf16.msra.mxu0 %v177
    %508 = vmatpush.bf16.msra.mxu0 %v174
    %509 = vmatpush.bf16.msra.mxu0 %v171
    %510 = vmatpush.bf16.msra.mxu0 %v168
    %511 = vmatpush.bf16.msra.mxu0 %v165
    %512 = vmatmul.bf16.gmra.mxu0 %v503
    %v513 = vpop.f32.mrf.mxu0
    %v514 = vadd.f32 %v79, %v513
    %v515 = vpop.f32.mrf.mxu0
    %516 = vdwg.mxu0
    %517 = vmatpush.bf16.msra.mxu0 %v187
    %518 = vmatpush.bf16.msra.mxu0 %v184
    %519 = vmatpush.bf16.msra.mxu0 %v181
    %520 = vmatpush.bf16.msra.mxu0 %v178
    %521 = vmatpush.bf16.msra.mxu0 %v175
    %522 = vmatpush.bf16.msra.mxu0 %v172
    %523 = vmatpush.bf16.msra.mxu0 %v169
    %524 = vmatpush.bf16.msra.mxu0 %v166
    %525 = vmatmul.bf16.gmra.mxu0 %v503
    %v526 = vpop.f32.mrf.mxu0
    %v527 = vadd.f32 %v80, %v526
    %v528 = vpop.f32.mrf.mxu0
    %529 = vdwg.mxu0
    %530 = vmatpush.bf16.msra.mxu0 %v188
    %531 = vmatpush.bf16.msra.mxu0 %v185
    %532 = vmatpush.bf16.msra.mxu0 %v182
    %533 = vmatpush.bf16.msra.mxu0 %v179
    %534 = vmatpush.bf16.msra.mxu0 %v176
    %535 = vmatpush.bf16.msra.mxu0 %v173
    %536 = vmatpush.bf16.msra.mxu0 %v170
    %537 = vmatpush.bf16.msra.mxu0 %v167
    %538 = vmatmul.bf16.gmra.mxu0 %v503
    %v539 = vpop.f32.mrf.mxu0
    %v540 = vadd.f32 %v81, %v539
    %v541 = vpop.f32.mrf.mxu0
    %542 = vdwg.mxu0
    %v543 = vadd.f32 %v500, %v514
    %v544 = vadd.f32 %v501, %v527
    %v545 = vxor.u32 %v543, 2147483648
    %v546 = vxor.u32 %v544, 2147483648
    %v547 = vmul.f32 %v545, 1.442695
    %v548 = vpow.pop %v547
    %v549 = vmul.f32 %v546, 1.442695
    %v550 = vpow.pop %v549
    %v551 = vadd.f32 %v548, 1.0
    %v552 = vadd.f32 %v550, 1.0
    %v553 = vrcp.pop %v551
    %v554 = vmul.f32 %v551, %v553
    %v555 = vsub.f32 1.0, %v554
    %v556 = vmul.f32 %v553, %v555
    %v557 = vadd.f32 %v553, %v556
    %vm558 = vweird.f32 %v551
    %vm559 = vweird.f32 %v553
    %vm560 = vmor %vm558, %vm559
    %v561 = vsel %vm560, %v553, %v557
    %v562 = vand.u32 2147483647, %v551
    %vm563 = vcmp.eq.f32.partialorder %v562, 8.507059e+37
    %v564 = vand.u32 %v551, 2147483648
    %v565 = vor.u32 1.1754944e-38, %v564
    %v566 = vsel %vm563, %v565, %v561
    %v567 = vmul.f32 1.0, %v566
    %v568 = vrcp.pop %v552
    %v569 = vmul.f32 %v552, %v568
    %v570 = vsub.f32 1.0, %v569
    %v571 = vmul.f32 %v568, %v570
    %v572 = vadd.f32 %v568, %v571
    %vm573 = vweird.f32 %v552
    %vm574 = vweird.f32 %v568
    %vm575 = vmor %vm573, %vm574
    %v576 = vsel %vm575, %v568, %v572
    %v577 = vand.u32 2147483647, %v552
    %vm578 = vcmp.eq.f32.partialorder %v577, 8.507059e+37
    %v579 = vand.u32 %v552, 2147483648
    %v580 = vor.u32 1.1754944e-38, %v579
    %v581 = vsel %vm578, %v580, %v576
    %v582 = vmul.f32 1.0, %v581
    %v583 = vmul.f32 %v567, %v540
    %v584 = vadd.f32 %v502, %v583
    %v585 = vtanh.pop %v584
    %v586 = vsub.f32 1.0, %v582
    %v587 = vmul.f32 %v586, %v585
    %v588 = vmul.f32 %v582, %v492
    %v589 = vadd.f32 %v587, %v588
    %vm590 = vcmp.eq.s32.totalorder %v74, 4
    %v591 = vsel %vm590, 1, 0
    %592 = vset.pattern.permute.xlu0 0
    %593 = vperm.xlu0 %592, %v591
    %v594 = vpop.permute.xlu0 %593
    %vm595 = vcmp.eq.s32.totalorder %v594, 1
    %v596 = vsel %vm595, %v589, %v499
    %v597 = vld [vmem:[%s0 + $0x60] sm:$0xff]
    %v598 = vld [vmem:[%s0 + $0x68] sm:$0xff]
    %v599 = vld [vmem:[%s0 + $0x70] sm:$0xff]
    %v600 = vpack.c.bf16 %v589, %v589
    %601 = vmatpush.bf16.msra.mxu0 %v186
    %602 = vmatpush.bf16.msra.mxu0 %v183
    %603 = vmatpush.bf16.msra.mxu0 %v180
    %604 = vmatpush.bf16.msra.mxu0 %v177
    %605 = vmatpush.bf16.msra.mxu0 %v174
    %606 = vmatpush.bf16.msra.mxu0 %v171
    %607 = vmatpush.bf16.msra.mxu0 %v168
    %608 = vmatpush.bf16.msra.mxu0 %v165
    %609 = vmatmul.bf16.gmra.mxu0 %v600
    %v610 = vpop.f32.mrf.mxu0
    %v611 = vadd.f32 %v79, %v610
    %v612 = vpop.f32.mrf.mxu0
    %613 = vdwg.mxu0
    %614 = vmatpush.bf16.msra.mxu0 %v187
    %615 = vmatpush.bf16.msra.mxu0 %v184
    %616 = vmatpush.bf16.msra.mxu0 %v181
    %617 = vmatpush.bf16.msra.mxu0 %v178
    %618 = vmatpush.bf16.msra.mxu0 %v175
    %619 = vmatpush.bf16.msra.mxu0 %v172
    %620 = vmatpush.bf16.msra.mxu0 %v169
    %621 = vmatpush.bf16.msra.mxu0 %v166
    %622 = vmatmul.bf16.gmra.mxu0 %v600
    %v623 = vpop.f32.mrf.mxu0
    %v624 = vadd.f32 %v80, %v623
    %v625 = vpop.f32.mrf.mxu0
    %626 = vdwg.mxu0
    %627 = vmatpush.bf16.msra.mxu0 %v188
    %628 = vmatpush.bf16.msra.mxu0 %v185
    %629 = vmatpush.bf16.msra.mxu0 %v182
    %630 = vmatpush.bf16.msra.mxu0 %v179
    %631 = vmatpush.bf16.msra.mxu0 %v176
    %632 = vmatpush.bf16.msra.mxu0 %v173
    %633 = vmatpush.bf16.msra.mxu0 %v170
    %634 = vmatpush.bf16.msra.mxu0 %v167
    %635 = vmatmul.bf16.gmra.mxu0 %v600
    %v636 = vpop.f32.mrf.mxu0
    %v637 = vadd.f32 %v81, %v636
    %v638 = vpop.f32.mrf.mxu0
    %639 = vdwg.mxu0
    %v640 = vadd.f32 %v597, %v611
    %v641 = vadd.f32 %v598, %v624
    %v642 = vxor.u32 %v640, 2147483648
    %v643 = vxor.u32 %v641, 2147483648
    %v644 = vmul.f32 %v642, 1.442695
    %v645 = vpow.pop %v644
    %v646 = vmul.f32 %v643, 1.442695
    %v647 = vpow.pop %v646
    %v648 = vadd.f32 %v645, 1.0
    %v649 = vadd.f32 %v647, 1.0
    %v650 = vrcp.pop %v648
    %v651 = vmul.f32 %v648, %v650
    %v652 = vsub.f32 1.0, %v651
    %v653 = vmul.f32 %v650, %v652
    %v654 = vadd.f32 %v650, %v653
    %vm655 = vweird.f32 %v648
    %vm656 = vweird.f32 %v650
    %vm657 = vmor %vm655, %vm656
    %v658 = vsel %vm657, %v650, %v654
    %v659 = vand.u32 2147483647, %v648
    %vm660 = vcmp.eq.f32.partialorder %v659, 8.507059e+37
    %v661 = vand.u32 %v648, 2147483648
    %v662 = vor.u32 1.1754944e-38, %v661
    %v663 = vsel %vm660, %v662, %v658
    %v664 = vmul.f32 1.0, %v663
    %v665 = vrcp.pop %v649
    %v666 = vmul.f32 %v649, %v665
    %v667 = vsub.f32 1.0, %v666
    %v668 = vmul.f32 %v665, %v667
    %v669 = vadd.f32 %v665, %v668
    %vm670 = vweird.f32 %v649
    %vm671 = vweird.f32 %v665
    %vm672 = vmor %vm670, %vm671
    %v673 = vsel %vm672, %v665, %v669
    %v674 = vand.u32 2147483647, %v649
    %vm675 = vcmp.eq.f32.partialorder %v674, 8.507059e+37
    %v676 = vand.u32 %v649, 2147483648
    %v677 = vor.u32 1.1754944e-38, %v676
    %v678 = vsel %vm675, %v677, %v673
    %v679 = vmul.f32 1.0, %v678
    %v680 = vmul.f32 %v664, %v637
    %v681 = vadd.f32 %v599, %v680
    %v682 = vtanh.pop %v681
    %v683 = vsub.f32 1.0, %v679
    %v684 = vmul.f32 %v683, %v682
    %v685 = vmul.f32 %v679, %v589
    %v686 = vadd.f32 %v684, %v685
    %vm687 = vcmp.eq.s32.totalorder %v74, 5
    %v688 = vsel %vm687, 1, 0
    %689 = vset.pattern.permute.xlu0 0
    %690 = vperm.xlu0 %689, %v688
    %v691 = vpop.permute.xlu0 %690
    %vm692 = vcmp.eq.s32.totalorder %v691, 1
    %v693 = vsel %vm692, %v686, %v596
    %v694 = vld [vmem:[%s0 + $0x78] sm:$0xff]
    %v695 = vld [vmem:[%s0 + $0x80] sm:$0xff]
    %v696 = vld [vmem:[%s0 + $0x88] sm:$0xff]
    %v697 = vpack.c.bf16 %v686, %v686
    %698 = vmatpush.bf16.msra.mxu0 %v186
    %699 = vmatpush.bf16.msra.mxu0 %v183
    %700 = vmatpush.bf16.msra.mxu0 %v180
    %701 = vmatpush.bf16.msra.mxu0 %v177
    %702 = vmatpush.bf16.msra.mxu0 %v174
    %703 = vmatpush.bf16.msra.mxu0 %v171
    %704 = vmatpush.bf16.msra.mxu0 %v168
    %705 = vmatpush.bf16.msra.mxu0 %v165
    %706 = vmatmul.bf16.gmra.mxu0 %v697
    %v707 = vpop.f32.mrf.mxu0
    %v708 = vadd.f32 %v79, %v707
    %v709 = vpop.f32.mrf.mxu0
    %710 = vdwg.mxu0
    %711 = vmatpush.bf16.msra.mxu0 %v187
    %712 = vmatpush.bf16.msra.mxu0 %v184
    %713 = vmatpush.bf16.msra.mxu0 %v181
    %714 = vmatpush.bf16.msra.mxu0 %v178
    %715 = vmatpush.bf16.msra.mxu0 %v175
    %716 = vmatpush.bf16.msra.mxu0 %v172
    %717 = vmatpush.bf16.msra.mxu0 %v169
    %718 = vmatpush.bf16.msra.mxu0 %v166
    %719 = vmatmul.bf16.gmra.mxu0 %v697
    %v720 = vpop.f32.mrf.mxu0
    %v721 = vadd.f32 %v80, %v720
    %v722 = vpop.f32.mrf.mxu0
    %723 = vdwg.mxu0
    %724 = vmatpush.bf16.msra.mxu0 %v188
    %725 = vmatpush.bf16.msra.mxu0 %v185
    %726 = vmatpush.bf16.msra.mxu0 %v182
    %727 = vmatpush.bf16.msra.mxu0 %v179
    %728 = vmatpush.bf16.msra.mxu0 %v176
    %729 = vmatpush.bf16.msra.mxu0 %v173
    %730 = vmatpush.bf16.msra.mxu0 %v170
    %731 = vmatpush.bf16.msra.mxu0 %v167
    %732 = vmatmul.bf16.gmra.mxu0 %v697
    %v733 = vpop.f32.mrf.mxu0
    %v734 = vadd.f32 %v81, %v733
    %v735 = vpop.f32.mrf.mxu0
    %736 = vdwg.mxu0
    %v737 = vadd.f32 %v694, %v708
    %v738 = vadd.f32 %v695, %v721
    %v739 = vxor.u32 %v737, 2147483648
    %v740 = vxor.u32 %v738, 2147483648
    %v741 = vmul.f32 %v739, 1.442695
    %v742 = vpow.pop %v741
    %v743 = vmul.f32 %v740, 1.442695
    %v744 = vpow.pop %v743
    %v745 = vadd.f32 %v742, 1.0
    %v746 = vadd.f32 %v744, 1.0
    %v747 = vrcp.pop %v745
    %v748 = vmul.f32 %v745, %v747
    %v749 = vsub.f32 1.0, %v748
    %v750 = vmul.f32 %v747, %v749
    %v751 = vadd.f32 %v747, %v750
    %vm752 = vweird.f32 %v745
    %vm753 = vweird.f32 %v747
    %vm754 = vmor %vm752, %vm753
    %v755 = vsel %vm754, %v747, %v751
    %v756 = vand.u32 2147483647, %v745
    %vm757 = vcmp.eq.f32.partialorder %v756, 8.507059e+37
    %v758 = vand.u32 %v745, 2147483648
    %v759 = vor.u32 1.1754944e-38, %v758
    %v760 = vsel %vm757, %v759, %v755
    %v761 = vmul.f32 1.0, %v760
    %v762 = vrcp.pop %v746
    %v763 = vmul.f32 %v746, %v762
    %v764 = vsub.f32 1.0, %v763
    %v765 = vmul.f32 %v762, %v764
    %v766 = vadd.f32 %v762, %v765
    %vm767 = vweird.f32 %v746
    %vm768 = vweird.f32 %v762
    %vm769 = vmor %vm767, %vm768
    %v770 = vsel %vm769, %v762, %v766
    %v771 = vand.u32 2147483647, %v746
    %vm772 = vcmp.eq.f32.partialorder %v771, 8.507059e+37
    %v773 = vand.u32 %v746, 2147483648
    %v774 = vor.u32 1.1754944e-38, %v773
    %v775 = vsel %vm772, %v774, %v770
    %v776 = vmul.f32 1.0, %v775
    %v777 = vmul.f32 %v761, %v734
    %v778 = vadd.f32 %v696, %v777
    %v779 = vtanh.pop %v778
    %v780 = vsub.f32 1.0, %v776
    %v781 = vmul.f32 %v780, %v779
    %v782 = vmul.f32 %v776, %v686
    %v783 = vadd.f32 %v781, %v782
    %vm784 = vcmp.eq.s32.totalorder %v74, 6
    %v785 = vsel %vm784, 1, 0
    %786 = vset.pattern.permute.xlu0 0
    %787 = vperm.xlu0 %786, %v785
    %v788 = vpop.permute.xlu0 %787
    %vm789 = vcmp.eq.s32.totalorder %v788, 1
    %v790 = vsel %vm789, %v783, %v693
    %v791 = vld [vmem:[%s0 + $0x90] sm:$0xff]
    %v792 = vld [vmem:[%s0 + $0x98] sm:$0xff]
    %v793 = vld [vmem:[%s0 + $0xa0] sm:$0xff]
    %v794 = vpack.c.bf16 %v783, %v783
    %795 = vmatpush.bf16.msra.mxu0 %v186
    %796 = vmatpush.bf16.msra.mxu0 %v183
    %797 = vmatpush.bf16.msra.mxu0 %v180
    %798 = vmatpush.bf16.msra.mxu0 %v177
    %799 = vmatpush.bf16.msra.mxu0 %v174
    %800 = vmatpush.bf16.msra.mxu0 %v171
    %801 = vmatpush.bf16.msra.mxu0 %v168
    %802 = vmatpush.bf16.msra.mxu0 %v165
    %803 = vmatmul.bf16.gmra.mxu0 %v794
    %v804 = vpop.f32.mrf.mxu0
    %v805 = vadd.f32 %v79, %v804
    %v806 = vpop.f32.mrf.mxu0
    %807 = vdwg.mxu0
    %808 = vmatpush.bf16.msra.mxu0 %v187
    %809 = vmatpush.bf16.msra.mxu0 %v184
    %810 = vmatpush.bf16.msra.mxu0 %v181
    %811 = vmatpush.bf16.msra.mxu0 %v178
    %812 = vmatpush.bf16.msra.mxu0 %v175
    %813 = vmatpush.bf16.msra.mxu0 %v172
    %814 = vmatpush.bf16.msra.mxu0 %v169
    %815 = vmatpush.bf16.msra.mxu0 %v166
    %816 = vmatmul.bf16.gmra.mxu0 %v794
    %v817 = vpop.f32.mrf.mxu0
    %v818 = vadd.f32 %v80, %v817
    %v819 = vpop.f32.mrf.mxu0
    %820 = vdwg.mxu0
    %821 = vmatpush.bf16.msra.mxu0 %v188
    %822 = vmatpush.bf16.msra.mxu0 %v185
    %823 = vmatpush.bf16.msra.mxu0 %v182
    %824 = vmatpush.bf16.msra.mxu0 %v179
    %825 = vmatpush.bf16.msra.mxu0 %v176
    %826 = vmatpush.bf16.msra.mxu0 %v173
    %827 = vmatpush.bf16.msra.mxu0 %v170
    %828 = vmatpush.bf16.msra.mxu0 %v167
    %829 = vmatmul.bf16.gmra.mxu0 %v794
    %v830 = vpop.f32.mrf.mxu0
    %v831 = vadd.f32 %v81, %v830
    %v832 = vpop.f32.mrf.mxu0
    %833 = vdwg.mxu0
    %v834 = vadd.f32 %v791, %v805
    %v835 = vadd.f32 %v792, %v818
    %v836 = vxor.u32 %v834, 2147483648
    %v837 = vxor.u32 %v835, 2147483648
    %v838 = vmul.f32 %v836, 1.442695
    %v839 = vpow.pop %v838
    %v840 = vmul.f32 %v837, 1.442695
    %v841 = vpow.pop %v840
    %v842 = vadd.f32 %v839, 1.0
    %v843 = vadd.f32 %v841, 1.0
    %v844 = vrcp.pop %v842
    %v845 = vmul.f32 %v842, %v844
    %v846 = vsub.f32 1.0, %v845
    %v847 = vmul.f32 %v844, %v846
    %v848 = vadd.f32 %v844, %v847
    %vm849 = vweird.f32 %v842
    %vm850 = vweird.f32 %v844
    %vm851 = vmor %vm849, %vm850
    %v852 = vsel %vm851, %v844, %v848
    %v853 = vand.u32 2147483647, %v842
    %vm854 = vcmp.eq.f32.partialorder %v853, 8.507059e+37
    %v855 = vand.u32 %v842, 2147483648
    %v856 = vor.u32 1.1754944e-38, %v855
    %v857 = vsel %vm854, %v856, %v852
    %v858 = vmul.f32 1.0, %v857
    %v859 = vrcp.pop %v843
    %v860 = vmul.f32 %v843, %v859
    %v861 = vsub.f32 1.0, %v860
    %v862 = vmul.f32 %v859, %v861
    %v863 = vadd.f32 %v859, %v862
    %vm864 = vweird.f32 %v843
    %vm865 = vweird.f32 %v859
    %vm866 = vmor %vm864, %vm865
    %v867 = vsel %vm866, %v859, %v863
    %v868 = vand.u32 2147483647, %v843
    %vm869 = vcmp.eq.f32.partialorder %v868, 8.507059e+37
    %v870 = vand.u32 %v843, 2147483648
    %v871 = vor.u32 1.1754944e-38, %v870
    %v872 = vsel %vm869, %v871, %v867
    %v873 = vmul.f32 1.0, %v872
    %v874 = vmul.f32 %v858, %v831
    %v875 = vadd.f32 %v793, %v874
    %v876 = vtanh.pop %v875
    %v877 = vsub.f32 1.0, %v873
    %v878 = vmul.f32 %v877, %v876
    %v879 = vmul.f32 %v873, %v783
    %v880 = vadd.f32 %v878, %v879
    %vm881 = vcmp.eq.s32.totalorder %v74, 7
    %v882 = vsel %vm881, 1, 0
    %883 = vset.pattern.permute.xlu0 0
    %884 = vperm.xlu0 %883, %v882
    %v885 = vpop.permute.xlu0 %884
    %vm886 = vcmp.eq.s32.totalorder %v885, 1
    %v887 = vsel %vm886, %v880, %v790
    %v888 = vld [vmem:[%s0 + $0xa8] sm:$0xff]
    %v889 = vld [vmem:[%s0 + $0xb0] sm:$0xff]
    %v890 = vld [vmem:[%s0 + $0xb8] sm:$0xff]
    %v891 = vpack.c.bf16 %v880, %v880
    %892 = vmatpush.bf16.msra.mxu0 %v186
    %893 = vmatpush.bf16.msra.mxu0 %v183
    %894 = vmatpush.bf16.msra.mxu0 %v180
    %895 = vmatpush.bf16.msra.mxu0 %v177
    %896 = vmatpush.bf16.msra.mxu0 %v174
    %897 = vmatpush.bf16.msra.mxu0 %v171
    %898 = vmatpush.bf16.msra.mxu0 %v168
    %899 = vmatpush.bf16.msra.mxu0 %v165
    %900 = vmatmul.bf16.gmra.mxu0 %v891
    %v901 = vpop.f32.mrf.mxu0
    %v902 = vadd.f32 %v79, %v901
    %v903 = vpop.f32.mrf.mxu0
    %904 = vdwg.mxu0
    %905 = vmatpush.bf16.msra.mxu0 %v187
    %906 = vmatpush.bf16.msra.mxu0 %v184
    %907 = vmatpush.bf16.msra.mxu0 %v181
    %908 = vmatpush.bf16.msra.mxu0 %v178
    %909 = vmatpush.bf16.msra.mxu0 %v175
    %910 = vmatpush.bf16.msra.mxu0 %v172
    %911 = vmatpush.bf16.msra.mxu0 %v169
    %912 = vmatpush.bf16.msra.mxu0 %v166
    %913 = vmatmul.bf16.gmra.mxu0 %v891
    %v914 = vpop.f32.mrf.mxu0
    %v915 = vadd.f32 %v80, %v914
    %v916 = vpop.f32.mrf.mxu0
    %917 = vdwg.mxu0
    %918 = vmatpush.bf16.msra.mxu0 %v188
    %919 = vmatpush.bf16.msra.mxu0 %v185
    %920 = vmatpush.bf16.msra.mxu0 %v182
    %921 = vmatpush.bf16.msra.mxu0 %v179
    %922 = vmatpush.bf16.msra.mxu0 %v176
    %923 = vmatpush.bf16.msra.mxu0 %v173
    %924 = vmatpush.bf16.msra.mxu0 %v170
    %925 = vmatpush.bf16.msra.mxu0 %v167
    %926 = vmatmul.bf16.gmra.mxu0 %v891
    %v927 = vpop.f32.mrf.mxu0
    %v928 = vadd.f32 %v81, %v927
    %v929 = vpop.f32.mrf.mxu0
    %930 = vdwg.mxu0
    %v931 = vadd.f32 %v888, %v902
    %v932 = vadd.f32 %v889, %v915
    %v933 = vxor.u32 %v931, 2147483648
    %v934 = vxor.u32 %v932, 2147483648
    %v935 = vmul.f32 %v933, 1.442695
    %v936 = vpow.pop %v935
    %v937 = vmul.f32 %v934, 1.442695
    %v938 = vpow.pop %v937
    %v939 = vadd.f32 %v936, 1.0
    %v940 = vadd.f32 %v938, 1.0
    %v941 = vrcp.pop %v939
    %v942 = vmul.f32 %v939, %v941
    %v943 = vsub.f32 1.0, %v942
    %v944 = vmul.f32 %v941, %v943
    %v945 = vadd.f32 %v941, %v944
    %vm946 = vweird.f32 %v939
    %vm947 = vweird.f32 %v941
    %vm948 = vmor %vm946, %vm947
    %v949 = vsel %vm948, %v941, %v945
    %v950 = vand.u32 2147483647, %v939
    %vm951 = vcmp.eq.f32.partialorder %v950, 8.507059e+37
    %v952 = vand.u32 %v939, 2147483648
    %v953 = vor.u32 1.1754944e-38, %v952
    %v954 = vsel %vm951, %v953, %v949
    %v955 = vmul.f32 1.0, %v954
    %v956 = vrcp.pop %v940
    %v957 = vmul.f32 %v940, %v956
    %v958 = vsub.f32 1.0, %v957
    %v959 = vmul.f32 %v956, %v958
    %v960 = vadd.f32 %v956, %v959
    %vm961 = vweird.f32 %v940
    %vm962 = vweird.f32 %v956
    %vm963 = vmor %vm961, %vm962
    %v964 = vsel %vm963, %v956, %v960
    %v965 = vand.u32 2147483647, %v940
    %vm966 = vcmp.eq.f32.partialorder %v965, 8.507059e+37
    %v967 = vand.u32 %v940, 2147483648
    %v968 = vor.u32 1.1754944e-38, %v967
    %v969 = vsel %vm966, %v968, %v964
    %v970 = vmul.f32 1.0, %v969
    %v971 = vmul.f32 %v955, %v928
    %v972 = vadd.f32 %v890, %v971
    %v973 = vtanh.pop %v972
    %v974 = vsub.f32 1.0, %v970
    %v975 = vmul.f32 %v974, %v973
    %v976 = vmul.f32 %v970, %v880
    %v977 = vadd.f32 %v975, %v976
    %vm978 = vcmp.eq.s32.totalorder %v74, 8
    %v979 = vsel %vm978, 1, 0
    %980 = vset.pattern.permute.xlu0 0
    %981 = vperm.xlu0 %980, %v979
    %v982 = vpop.permute.xlu0 %981
    %vm983 = vcmp.eq.s32.totalorder %v982, 1
    %v984 = vsel %vm983, %v977, %v887
    %v985 = vld [vmem:[%s5] sm:$0xff]
    %v986 = vld [vmem:[%s5 + $0x8] sm:$0xf]
    %v987 = vld [vmem:[%s5 + $0xc] sm:$0xff]
    %v988 = vld [vmem:[%s5 + $0x14] sm:$0xf]
    %v989 = vld [vmem:[%s5 + $0x18] sm:$0xff]
    %v990 = vld [vmem:[%s5 + $0x20] sm:$0xf]
    %v991 = vld [vmem:[%s5 + $0x24] sm:$0xff]
    %v992 = vld [vmem:[%s5 + $0x2c] sm:$0xf]
    %v993 = vld [vmem:[%s5 + $0x30] sm:$0xff]
    %v994 = vld [vmem:[%s5 + $0x38] sm:$0xf]
    %v995 = vld [vmem:[%s5 + $0x3c] sm:$0xff]
    %v996 = vld [vmem:[%s5 + $0x44] sm:$0xf]
    %v997 = vld [vmem:[%s5 + $0x48] sm:$0xff]
    %v998 = vld [vmem:[%s5 + $0x50] sm:$0xf]
    %v999 = vld [vmem:[%s5 + $0x54] sm:$0xff]
    %v1000 = vld [vmem:[%s5 + $0x5c] sm:$0xf]
    %v1001 = vld [vmem:[%s5 + $0x60] sm:$0xff]
    %v1002 = vld [vmem:[%s5 + $0x68] sm:$0xf]
    %v1003 = vld [vmem:[%s5 + $0x6c] sm:$0xff]
    %v1004 = vld [vmem:[%s5 + $0x74] sm:$0xf]
    %v1005 = vld [vmem:[%s5 + $0x78] sm:$0xff]
    %v1006 = vld [vmem:[%s5 + $0x80] sm:$0xf]
    %v1007 = vld [vmem:[%s5 + $0x84] sm:$0xff]
    %v1008 = vld [vmem:[%s5 + $0x8c] sm:$0xf]
    %v1009 = vld [vmem:[%s5 + $0x90] sm:$0xff]
    %v1010 = vld [vmem:[%s5 + $0x98] sm:$0xf]
    %v1011 = vld [vmem:[%s5 + $0x9c] sm:$0xff]
    %v1012 = vld [vmem:[%s5 + $0xa4] sm:$0xf]
    %v1013 = vld [vmem:[%s5 + $0xa8] sm:$0xff]
    %v1014 = vld [vmem:[%s5 + $0xb0] sm:$0xf]
    %v1015 = vld [vmem:[%s5 + $0xb4] sm:$0xff]
    %v1016 = vld [vmem:[%s5 + $0xbc] sm:$0xf]
    %v1017 = vld [vmem:[%s6] sm:$0x7]
    %v1018 = vld [vmem:[%s4] sm:$0xff]
    %v1019 = vld [vmem:[%s4 + $0x8] sm:$0xff]
    %v1020 = vld [vmem:[%s4 + $0x10] sm:$0xff]
    %v1021 = vpack.c.bf16 %v984, %v984
    %v1023 = vperm.slane %v1017, 0
    %v1024 = vperm.slane %v1017, 1
    %v1025 = vperm.slane %v1017, 2
    %v1061 = vunpack.c.l.b16 %v985
    %v1062 = vunpack.c.h.b16 %v985
    %v1063 = vunpack.c.l.b16 %v986
    %v1064 = vunpack.c.l.b16 %v987
    %v1065 = vunpack.c.h.b16 %v987
    %v1066 = vunpack.c.l.b16 %v988
    %v1067 = vunpack.c.l.b16 %v989
    %v1068 = vunpack.c.h.b16 %v989
    %v1069 = vunpack.c.l.b16 %v990
    %v1070 = vunpack.c.l.b16 %v991
    %v1071 = vunpack.c.h.b16 %v991
    %v1072 = vunpack.c.l.b16 %v992
    %v1073 = vunpack.c.l.b16 %v993
    %v1074 = vunpack.c.h.b16 %v993
    %v1075 = vunpack.c.l.b16 %v994
    %v1076 = vunpack.c.l.b16 %v995
    %v1077 = vunpack.c.h.b16 %v995
    %v1078 = vunpack.c.l.b16 %v996
    %v1079 = vunpack.c.l.b16 %v997
    %v1080 = vunpack.c.h.b16 %v997
    %v1081 = vunpack.c.l.b16 %v998
    %v1082 = vunpack.c.l.b16 %v999
    %v1083 = vunpack.c.h.b16 %v999
    %v1084 = vunpack.c.l.b16 %v1000
    %v1085 = vunpack.c.l.b16 %v1001
    %v1086 = vunpack.c.h.b16 %v1001
    %v1087 = vunpack.c.l.b16 %v1002
    %v1088 = vunpack.c.l.b16 %v1003
    %v1089 = vunpack.c.h.b16 %v1003
    %v1090 = vunpack.c.l.b16 %v1004
    %v1091 = vunpack.c.l.b16 %v1005
    %v1092 = vunpack.c.h.b16 %v1005
    %v1093 = vunpack.c.l.b16 %v1006
    %v1094 = vunpack.c.l.b16 %v1007
    %v1095 = vunpack.c.h.b16 %v1007
    %v1096 = vunpack.c.l.b16 %v1008
    %v1097 = vunpack.c.l.b16 %v1009
    %v1098 = vunpack.c.h.b16 %v1009
    %v1099 = vunpack.c.l.b16 %v1010
    %v1100 = vunpack.c.l.b16 %v1011
    %v1101 = vunpack.c.h.b16 %v1011
    %v1102 = vunpack.c.l.b16 %v1012
    %v1103 = vunpack.c.l.b16 %v1013
    %v1104 = vunpack.c.h.b16 %v1013
    %v1105 = vunpack.c.l.b16 %v1014
    %v1106 = vunpack.c.l.b16 %v1015
    %v1107 = vunpack.c.h.b16 %v1015
    %v1108 = vunpack.c.l.b16 %v1016
    %v1109 = vpack.c.b16 %v1064, %v1061
    %v1110 = vpack.c.b16 %v1065, %v1062
    %v1111 = vpack.c.b16 %v1066, %v1063
    %v1112 = vpack.c.b16 %v1070, %v1067
    %v1113 = vpack.c.b16 %v1071, %v1068
    %v1114 = vpack.c.b16 %v1072, %v1069
    %v1115 = vpack.c.b16 %v1076, %v1073
    %v1116 = vpack.c.b16 %v1077, %v1074
    %v1117 = vpack.c.b16 %v1078, %v1075
    %v1118 = vpack.c.b16 %v1082, %v1079
    %v1119 = vpack.c.b16 %v1083, %v1080
    %v1120 = vpack.c.b16 %v1084, %v1081
    %v1121 = vpack.c.b16 %v1088, %v1085
    %v1122 = vpack.c.b16 %v1089, %v1086
    %v1123 = vpack.c.b16 %v1090, %v1087
    %v1124 = vpack.c.b16 %v1094, %v1091
    %v1125 = vpack.c.b16 %v1095, %v1092
    %v1126 = vpack.c.b16 %v1096, %v1093
    %v1127 = vpack.c.b16 %v1100, %v1097
    %v1128 = vpack.c.b16 %v1101, %v1098
    %v1129 = vpack.c.b16 %v1102, %v1099
    %v1130 = vpack.c.b16 %v1106, %v1103
    %v1131 = vpack.c.b16 %v1107, %v1104
    %v1132 = vpack.c.b16 %v1108, %v1105
    %1157 = vmatpush.bf16.msra.mxu0 %v1130
    %1158 = vmatpush.bf16.msra.mxu0 %v1127
    %1159 = vmatpush.bf16.msra.mxu0 %v1124
    %1160 = vmatpush.bf16.msra.mxu0 %v1121
    %1161 = vmatpush.bf16.msra.mxu0 %v1118
    %1162 = vmatpush.bf16.msra.mxu0 %v1115
    %1163 = vmatpush.bf16.msra.mxu0 %v1112
    %1164 = vmatpush.bf16.msra.mxu0 %v1109
    %1165 = vmatmul.bf16.gmra.mxu0 %v1021
    %v1166 = vpop.f32.mrf.mxu0
    %v1167 = vadd.f32 %v1023, %v1166
    %v1168 = vpop.f32.mrf.mxu0
    %1169 = vdwg.mxu0
    %1170 = vmatpush.bf16.msra.mxu0 %v1131
    %1171 = vmatpush.bf16.msra.mxu0 %v1128
    %1172 = vmatpush.bf16.msra.mxu0 %v1125
    %1173 = vmatpush.bf16.msra.mxu0 %v1122
    %1174 = vmatpush.bf16.msra.mxu0 %v1119
    %1175 = vmatpush.bf16.msra.mxu0 %v1116
    %1176 = vmatpush.bf16.msra.mxu0 %v1113
    %1177 = vmatpush.bf16.msra.mxu0 %v1110
    %1178 = vmatmul.bf16.gmra.mxu0 %v1021
    %v1179 = vpop.f32.mrf.mxu0
    %v1180 = vadd.f32 %v1024, %v1179
    %v1181 = vpop.f32.mrf.mxu0
    %1182 = vdwg.mxu0
    %1183 = vmatpush.bf16.msra.mxu0 %v1132
    %1184 = vmatpush.bf16.msra.mxu0 %v1129
    %1185 = vmatpush.bf16.msra.mxu0 %v1126
    %1186 = vmatpush.bf16.msra.mxu0 %v1123
    %1187 = vmatpush.bf16.msra.mxu0 %v1120
    %1188 = vmatpush.bf16.msra.mxu0 %v1117
    %1189 = vmatpush.bf16.msra.mxu0 %v1114
    %1190 = vmatpush.bf16.msra.mxu0 %v1111
    %1191 = vmatmul.bf16.gmra.mxu0 %v1021
    %v1192 = vpop.f32.mrf.mxu0
    %v1193 = vadd.f32 %v1025, %v1192
    %v1194 = vpop.f32.mrf.mxu0
    %1195 = vdwg.mxu0
    %v1196 = vadd.f32 %v1018, %v1167
    %v1197 = vadd.f32 %v1019, %v1180
    %v1198 = vxor.u32 %v1196, 2147483648
    %v1199 = vxor.u32 %v1197, 2147483648
    %v1200 = vmul.f32 %v1198, 1.442695
    %v1201 = vpow.pop %v1200
    %v1202 = vmul.f32 %v1199, 1.442695
    %v1203 = vpow.pop %v1202
    %v1204 = vadd.f32 %v1201, 1.0
    %v1205 = vadd.f32 %v1203, 1.0
    %v1206 = vrcp.pop %v1204
    %v1207 = vmul.f32 %v1204, %v1206
    %v1208 = vsub.f32 1.0, %v1207
    %v1209 = vmul.f32 %v1206, %v1208
    %v1210 = vadd.f32 %v1206, %v1209
    %vm1211 = vweird.f32 %v1204
    %vm1212 = vweird.f32 %v1206
    %vm1213 = vmor %vm1211, %vm1212
    %v1214 = vsel %vm1213, %v1206, %v1210
    %v1215 = vand.u32 2147483647, %v1204
    %vm1216 = vcmp.eq.f32.partialorder %v1215, 8.507059e+37
    %v1217 = vand.u32 %v1204, 2147483648
    %v1218 = vor.u32 1.1754944e-38, %v1217
    %v1219 = vsel %vm1216, %v1218, %v1214
    %v1220 = vmul.f32 1.0, %v1219
    %v1221 = vrcp.pop %v1205
    %v1222 = vmul.f32 %v1205, %v1221
    %v1223 = vsub.f32 1.0, %v1222
    %v1224 = vmul.f32 %v1221, %v1223
    %v1225 = vadd.f32 %v1221, %v1224
    %vm1226 = vweird.f32 %v1205
    %vm1227 = vweird.f32 %v1221
    %vm1228 = vmor %vm1226, %vm1227
    %v1229 = vsel %vm1228, %v1221, %v1225
    %v1230 = vand.u32 2147483647, %v1205
    %vm1231 = vcmp.eq.f32.partialorder %v1230, 8.507059e+37
    %v1232 = vand.u32 %v1205, 2147483648
    %v1233 = vor.u32 1.1754944e-38, %v1232
    %v1234 = vsel %vm1231, %v1233, %v1229
    %v1235 = vmul.f32 1.0, %v1234
    %v1236 = vmul.f32 %v1220, %v1193
    %v1237 = vadd.f32 %v1020, %v1236
    %v1238 = vtanh.pop %v1237
    %v1239 = vsub.f32 1.0, %v1235
    %v1240 = vmul.f32 %v1239, %v1238
    %v1241 = vmul.f32 %v1235, %v984
    %v1242 = vadd.f32 %v1240, %v1241
    %1243 = vst [vmem:[#allocation2] sm:$0xff] %v1242
    %v1244 = vld [vmem:[%s4 + $0x18] sm:$0xff]
    %v1245 = vld [vmem:[%s4 + $0x20] sm:$0xff]
    %v1246 = vld [vmem:[%s4 + $0x28] sm:$0xff]
    %v1247 = vpack.c.bf16 %v1242, %v1242
    %1248 = vmatpush.bf16.msra.mxu0 %v1130
    %1249 = vmatpush.bf16.msra.mxu0 %v1127
    %1250 = vmatpush.bf16.msra.mxu0 %v1124
    %1251 = vmatpush.bf16.msra.mxu0 %v1121
    %1252 = vmatpush.bf16.msra.mxu0 %v1118
    %1253 = vmatpush.bf16.msra.mxu0 %v1115
    %1254 = vmatpush.bf16.msra.mxu0 %v1112
    %1255 = vmatpush.bf16.msra.mxu0 %v1109
    %1256 = vmatmul.bf16.gmra.mxu0 %v1247
    %v1257 = vpop.f32.mrf.mxu0
    %v1258 = vadd.f32 %v1023, %v1257
    %v1259 = vpop.f32.mrf.mxu0
    %1260 = vdwg.mxu0
    %1261 = vmatpush.bf16.msra.mxu0 %v1131
    %1262 = vmatpush.bf16.msra.mxu0 %v1128
    %1263 = vmatpush.bf16.msra.mxu0 %v1125
    %1264 = vmatpush.bf16.msra.mxu0 %v1122
    %1265 = vmatpush.bf16.msra.mxu0 %v1119
    %1266 = vmatpush.bf16.msra.mxu0 %v1116
    %1267 = vmatpush.bf16.msra.mxu0 %v1113
    %1268 = vmatpush.bf16.msra.mxu0 %v1110
    %1269 = vmatmul.bf16.gmra.mxu0 %v1247
    %v1270 = vpop.f32.mrf.mxu0
    %v1271 = vadd.f32 %v1024, %v1270
    %v1272 = vpop.f32.mrf.mxu0
    %1273 = vdwg.mxu0
    %1274 = vmatpush.bf16.msra.mxu0 %v1132
    %1275 = vmatpush.bf16.msra.mxu0 %v1129
    %1276 = vmatpush.bf16.msra.mxu0 %v1126
    %1277 = vmatpush.bf16.msra.mxu0 %v1123
    %1278 = vmatpush.bf16.msra.mxu0 %v1120
    %1279 = vmatpush.bf16.msra.mxu0 %v1117
    %1280 = vmatpush.bf16.msra.mxu0 %v1114
    %1281 = vmatpush.bf16.msra.mxu0 %v1111
    %1282 = vmatmul.bf16.gmra.mxu0 %v1247
    %v1283 = vpop.f32.mrf.mxu0
    %v1284 = vadd.f32 %v1025, %v1283
    %v1285 = vpop.f32.mrf.mxu0
    %1286 = vdwg.mxu0
    %v1287 = vadd.f32 %v1244, %v1258
    %v1288 = vadd.f32 %v1245, %v1271
    %v1289 = vxor.u32 %v1287, 2147483648
    %v1290 = vxor.u32 %v1288, 2147483648
    %v1291 = vmul.f32 %v1289, 1.442695
    %v1292 = vpow.pop %v1291
    %v1293 = vmul.f32 %v1290, 1.442695
    %v1294 = vpow.pop %v1293
    %v1295 = vadd.f32 %v1292, 1.0
    %v1296 = vadd.f32 %v1294, 1.0
    %v1297 = vrcp.pop %v1295
    %v1298 = vmul.f32 %v1295, %v1297
    %v1299 = vsub.f32 1.0, %v1298
    %v1300 = vmul.f32 %v1297, %v1299
    %v1301 = vadd.f32 %v1297, %v1300
    %vm1302 = vweird.f32 %v1295
    %vm1303 = vweird.f32 %v1297
    %vm1304 = vmor %vm1302, %vm1303
    %v1305 = vsel %vm1304, %v1297, %v1301
    %v1306 = vand.u32 2147483647, %v1295
    %vm1307 = vcmp.eq.f32.partialorder %v1306, 8.507059e+37
    %v1308 = vand.u32 %v1295, 2147483648
    %v1309 = vor.u32 1.1754944e-38, %v1308
    %v1310 = vsel %vm1307, %v1309, %v1305
    %v1311 = vmul.f32 1.0, %v1310
    %v1312 = vrcp.pop %v1296
    %v1313 = vmul.f32 %v1296, %v1312
    %v1314 = vsub.f32 1.0, %v1313
    %v1315 = vmul.f32 %v1312, %v1314
    %v1316 = vadd.f32 %v1312, %v1315
    %vm1317 = vweird.f32 %v1296
    %vm1318 = vweird.f32 %v1312
    %vm1319 = vmor %vm1317, %vm1318
    %v1320 = vsel %vm1319, %v1312, %v1316
    %v1321 = vand.u32 2147483647, %v1296
    %vm1322 = vcmp.eq.f32.partialorder %v1321, 8.507059e+37
    %v1323 = vand.u32 %v1296, 2147483648
    %v1324 = vor.u32 1.1754944e-38, %v1323
    %v1325 = vsel %vm1322, %v1324, %v1320
    %v1326 = vmul.f32 1.0, %v1325
    %v1327 = vmul.f32 %v1311, %v1284
    %v1328 = vadd.f32 %v1246, %v1327
    %v1329 = vtanh.pop %v1328
    %v1330 = vsub.f32 1.0, %v1326
    %v1331 = vmul.f32 %v1330, %v1329
    %v1332 = vmul.f32 %v1326, %v1242
    %v1333 = vadd.f32 %v1331, %v1332
    %1334 = vst [vmem:[#allocation2 + $0x8] sm:$0xff] %v1333
    %v1335 = vld [vmem:[%s4 + $0x30] sm:$0xff]
    %v1336 = vld [vmem:[%s4 + $0x38] sm:$0xff]
    %v1337 = vld [vmem:[%s4 + $0x40] sm:$0xff]
    %v1338 = vpack.c.bf16 %v1333, %v1333
    %1339 = vmatpush.bf16.msra.mxu0 %v1130
    %1340 = vmatpush.bf16.msra.mxu0 %v1127
    %1341 = vmatpush.bf16.msra.mxu0 %v1124
    %1342 = vmatpush.bf16.msra.mxu0 %v1121
    %1343 = vmatpush.bf16.msra.mxu0 %v1118
    %1344 = vmatpush.bf16.msra.mxu0 %v1115
    %1345 = vmatpush.bf16.msra.mxu0 %v1112
    %1346 = vmatpush.bf16.msra.mxu0 %v1109
    %1347 = vmatmul.bf16.gmra.mxu0 %v1338
    %v1348 = vpop.f32.mrf.mxu0
    %v1349 = vadd.f32 %v1023, %v1348
    %v1350 = vpop.f32.mrf.mxu0
    %1351 = vdwg.mxu0
    %1352 = vmatpush.bf16.msra.mxu0 %v1131
    %1353 = vmatpush.bf16.msra.mxu0 %v1128
    %1354 = vmatpush.bf16.msra.mxu0 %v1125
    %1355 = vmatpush.bf16.msra.mxu0 %v1122
    %1356 = vmatpush.bf16.msra.mxu0 %v1119
    %1357 = vmatpush.bf16.msra.mxu0 %v1116
    %1358 = vmatpush.bf16.msra.mxu0 %v1113
    %1359 = vmatpush.bf16.msra.mxu0 %v1110
    %1360 = vmatmul.bf16.gmra.mxu0 %v1338
    %v1361 = vpop.f32.mrf.mxu0
    %v1362 = vadd.f32 %v1024, %v1361
    %v1363 = vpop.f32.mrf.mxu0
    %1364 = vdwg.mxu0
    %1365 = vmatpush.bf16.msra.mxu0 %v1132
    %1366 = vmatpush.bf16.msra.mxu0 %v1129
    %1367 = vmatpush.bf16.msra.mxu0 %v1126
    %1368 = vmatpush.bf16.msra.mxu0 %v1123
    %1369 = vmatpush.bf16.msra.mxu0 %v1120
    %1370 = vmatpush.bf16.msra.mxu0 %v1117
    %1371 = vmatpush.bf16.msra.mxu0 %v1114
    %1372 = vmatpush.bf16.msra.mxu0 %v1111
    %1373 = vmatmul.bf16.gmra.mxu0 %v1338
    %v1374 = vpop.f32.mrf.mxu0
    %v1375 = vadd.f32 %v1025, %v1374
    %v1376 = vpop.f32.mrf.mxu0
    %1377 = vdwg.mxu0
    %v1378 = vadd.f32 %v1335, %v1349
    %v1379 = vadd.f32 %v1336, %v1362
    %v1380 = vxor.u32 %v1378, 2147483648
    %v1381 = vxor.u32 %v1379, 2147483648
    %v1382 = vmul.f32 %v1380, 1.442695
    %v1383 = vpow.pop %v1382
    %v1384 = vmul.f32 %v1381, 1.442695
    %v1385 = vpow.pop %v1384
    %v1386 = vadd.f32 %v1383, 1.0
    %v1387 = vadd.f32 %v1385, 1.0
    %v1388 = vrcp.pop %v1386
    %v1389 = vmul.f32 %v1386, %v1388
    %v1390 = vsub.f32 1.0, %v1389
    %v1391 = vmul.f32 %v1388, %v1390
    %v1392 = vadd.f32 %v1388, %v1391
    %vm1393 = vweird.f32 %v1386
    %vm1394 = vweird.f32 %v1388
    %vm1395 = vmor %vm1393, %vm1394
    %v1396 = vsel %vm1395, %v1388, %v1392
    %v1397 = vand.u32 2147483647, %v1386
    %vm1398 = vcmp.eq.f32.partialorder %v1397, 8.507059e+37
    %v1399 = vand.u32 %v1386, 2147483648
    %v1400 = vor.u32 1.1754944e-38, %v1399
    %v1401 = vsel %vm1398, %v1400, %v1396
    %v1402 = vmul.f32 1.0, %v1401
    %v1403 = vrcp.pop %v1387
    %v1404 = vmul.f32 %v1387, %v1403
    %v1405 = vsub.f32 1.0, %v1404
    %v1406 = vmul.f32 %v1403, %v1405
    %v1407 = vadd.f32 %v1403, %v1406
    %vm1408 = vweird.f32 %v1387
    %vm1409 = vweird.f32 %v1403
    %vm1410 = vmor %vm1408, %vm1409
    %v1411 = vsel %vm1410, %v1403, %v1407
    %v1412 = vand.u32 2147483647, %v1387
    %vm1413 = vcmp.eq.f32.partialorder %v1412, 8.507059e+37
    %v1414 = vand.u32 %v1387, 2147483648
    %v1415 = vor.u32 1.1754944e-38, %v1414
    %v1416 = vsel %vm1413, %v1415, %v1411
    %v1417 = vmul.f32 1.0, %v1416
    %v1418 = vmul.f32 %v1402, %v1375
    %v1419 = vadd.f32 %v1337, %v1418
    %v1420 = vtanh.pop %v1419
    %v1421 = vsub.f32 1.0, %v1417
    %v1422 = vmul.f32 %v1421, %v1420
    %v1423 = vmul.f32 %v1417, %v1333
    %v1424 = vadd.f32 %v1422, %v1423
    %1425 = vst [vmem:[#allocation2 + $0x10] sm:$0xff] %v1424
    %v1426 = vld [vmem:[%s4 + $0x48] sm:$0xff]
    %v1427 = vld [vmem:[%s4 + $0x50] sm:$0xff]
    %v1428 = vld [vmem:[%s4 + $0x58] sm:$0xff]
    %v1429 = vpack.c.bf16 %v1424, %v1424
    %1430 = vmatpush.bf16.msra.mxu0 %v1130
    %1431 = vmatpush.bf16.msra.mxu0 %v1127
    %1432 = vmatpush.bf16.msra.mxu0 %v1124
    %1433 = vmatpush.bf16.msra.mxu0 %v1121
    %1434 = vmatpush.bf16.msra.mxu0 %v1118
    %1435 = vmatpush.bf16.msra.mxu0 %v1115
    %1436 = vmatpush.bf16.msra.mxu0 %v1112
    %1437 = vmatpush.bf16.msra.mxu0 %v1109
    %1438 = vmatmul.bf16.gmra.mxu0 %v1429
    %v1439 = vpop.f32.mrf.mxu0
    %v1440 = vadd.f32 %v1023, %v1439
    %v1441 = vpop.f32.mrf.mxu0
    %1442 = vdwg.mxu0
    %1443 = vmatpush.bf16.msra.mxu0 %v1131
    %1444 = vmatpush.bf16.msra.mxu0 %v1128
    %1445 = vmatpush.bf16.msra.mxu0 %v1125
    %1446 = vmatpush.bf16.msra.mxu0 %v1122
    %1447 = vmatpush.bf16.msra.mxu0 %v1119
    %1448 = vmatpush.bf16.msra.mxu0 %v1116
    %1449 = vmatpush.bf16.msra.mxu0 %v1113
    %1450 = vmatpush.bf16.msra.mxu0 %v1110
    %1451 = vmatmul.bf16.gmra.mxu0 %v1429
    %v1452 = vpop.f32.mrf.mxu0
    %v1453 = vadd.f32 %v1024, %v1452
    %v1454 = vpop.f32.mrf.mxu0
    %1455 = vdwg.mxu0
    %1456 = vmatpush.bf16.msra.mxu0 %v1132
    %1457 = vmatpush.bf16.msra.mxu0 %v1129
    %1458 = vmatpush.bf16.msra.mxu0 %v1126
    %1459 = vmatpush.bf16.msra.mxu0 %v1123
    %1460 = vmatpush.bf16.msra.mxu0 %v1120
    %1461 = vmatpush.bf16.msra.mxu0 %v1117
    %1462 = vmatpush.bf16.msra.mxu0 %v1114
    %1463 = vmatpush.bf16.msra.mxu0 %v1111
    %1464 = vmatmul.bf16.gmra.mxu0 %v1429
    %v1465 = vpop.f32.mrf.mxu0
    %v1466 = vadd.f32 %v1025, %v1465
    %v1467 = vpop.f32.mrf.mxu0
    %1468 = vdwg.mxu0
    %v1469 = vadd.f32 %v1426, %v1440
    %v1470 = vadd.f32 %v1427, %v1453
    %v1471 = vxor.u32 %v1469, 2147483648
    %v1472 = vxor.u32 %v1470, 2147483648
    %v1473 = vmul.f32 %v1471, 1.442695
    %v1474 = vpow.pop %v1473
    %v1475 = vmul.f32 %v1472, 1.442695
    %v1476 = vpow.pop %v1475
    %v1477 = vadd.f32 %v1474, 1.0
    %v1478 = vadd.f32 %v1476, 1.0
    %v1479 = vrcp.pop %v1477
    %v1480 = vmul.f32 %v1477, %v1479
    %v1481 = vsub.f32 1.0, %v1480
    %v1482 = vmul.f32 %v1479, %v1481
    %v1483 = vadd.f32 %v1479, %v1482
    %vm1484 = vweird.f32 %v1477
    %vm1485 = vweird.f32 %v1479
    %vm1486 = vmor %vm1484, %vm1485
    %v1487 = vsel %vm1486, %v1479, %v1483
    %v1488 = vand.u32 2147483647, %v1477
    %vm1489 = vcmp.eq.f32.partialorder %v1488, 8.507059e+37
    %v1490 = vand.u32 %v1477, 2147483648
    %v1491 = vor.u32 1.1754944e-38, %v1490
    %v1492 = vsel %vm1489, %v1491, %v1487
    %v1493 = vmul.f32 1.0, %v1492
    %v1494 = vrcp.pop %v1478
    %v1495 = vmul.f32 %v1478, %v1494
    %v1496 = vsub.f32 1.0, %v1495
    %v1497 = vmul.f32 %v1494, %v1496
    %v1498 = vadd.f32 %v1494, %v1497
    %vm1499 = vweird.f32 %v1478
    %vm1500 = vweird.f32 %v1494
    %vm1501 = vmor %vm1499, %vm1500
    %v1502 = vsel %vm1501, %v1494, %v1498
    %v1503 = vand.u32 2147483647, %v1478
    %vm1504 = vcmp.eq.f32.partialorder %v1503, 8.507059e+37
    %v1505 = vand.u32 %v1478, 2147483648
    %v1506 = vor.u32 1.1754944e-38, %v1505
    %v1507 = vsel %vm1504, %v1506, %v1502
    %v1508 = vmul.f32 1.0, %v1507
    %v1509 = vmul.f32 %v1493, %v1466
    %v1510 = vadd.f32 %v1428, %v1509
    %v1511 = vtanh.pop %v1510
    %v1512 = vsub.f32 1.0, %v1508
    %v1513 = vmul.f32 %v1512, %v1511
    %v1514 = vmul.f32 %v1508, %v1424
    %v1515 = vadd.f32 %v1513, %v1514
    %1516 = vst [vmem:[#allocation2 + $0x18] sm:$0xff] %v1515
    %v1517 = vld [vmem:[%s4 + $0x60] sm:$0xff]
    %v1518 = vld [vmem:[%s4 + $0x68] sm:$0xff]
    %v1519 = vld [vmem:[%s4 + $0x70] sm:$0xff]
    %v1520 = vpack.c.bf16 %v1515, %v1515
    %1521 = vmatpush.bf16.msra.mxu0 %v1130
    %1522 = vmatpush.bf16.msra.mxu0 %v1127
    %1523 = vmatpush.bf16.msra.mxu0 %v1124
    %1524 = vmatpush.bf16.msra.mxu0 %v1121
    %1525 = vmatpush.bf16.msra.mxu0 %v1118
    %1526 = vmatpush.bf16.msra.mxu0 %v1115
    %1527 = vmatpush.bf16.msra.mxu0 %v1112
    %1528 = vmatpush.bf16.msra.mxu0 %v1109
    %1529 = vmatmul.bf16.gmra.mxu0 %v1520
    %v1530 = vpop.f32.mrf.mxu0
    %v1531 = vadd.f32 %v1023, %v1530
    %v1532 = vpop.f32.mrf.mxu0
    %1533 = vdwg.mxu0
    %1534 = vmatpush.bf16.msra.mxu0 %v1131
    %1535 = vmatpush.bf16.msra.mxu0 %v1128
    %1536 = vmatpush.bf16.msra.mxu0 %v1125
    %1537 = vmatpush.bf16.msra.mxu0 %v1122
    %1538 = vmatpush.bf16.msra.mxu0 %v1119
    %1539 = vmatpush.bf16.msra.mxu0 %v1116
    %1540 = vmatpush.bf16.msra.mxu0 %v1113
    %1541 = vmatpush.bf16.msra.mxu0 %v1110
    %1542 = vmatmul.bf16.gmra.mxu0 %v1520
    %v1543 = vpop.f32.mrf.mxu0
    %v1544 = vadd.f32 %v1024, %v1543
    %v1545 = vpop.f32.mrf.mxu0
    %1546 = vdwg.mxu0
    %1547 = vmatpush.bf16.msra.mxu0 %v1132
    %1548 = vmatpush.bf16.msra.mxu0 %v1129
    %1549 = vmatpush.bf16.msra.mxu0 %v1126
    %1550 = vmatpush.bf16.msra.mxu0 %v1123
    %1551 = vmatpush.bf16.msra.mxu0 %v1120
    %1552 = vmatpush.bf16.msra.mxu0 %v1117
    %1553 = vmatpush.bf16.msra.mxu0 %v1114
    %1554 = vmatpush.bf16.msra.mxu0 %v1111
    %1555 = vmatmul.bf16.gmra.mxu0 %v1520
    %v1556 = vpop.f32.mrf.mxu0
    %v1557 = vadd.f32 %v1025, %v1556
    %v1558 = vpop.f32.mrf.mxu0
    %1559 = vdwg.mxu0
    %v1560 = vadd.f32 %v1517, %v1531
    %v1561 = vadd.f32 %v1518, %v1544
    %v1562 = vxor.u32 %v1560, 2147483648
    %v1563 = vxor.u32 %v1561, 2147483648
    %v1564 = vmul.f32 %v1562, 1.442695
    %v1565 = vpow.pop %v1564
    %v1566 = vmul.f32 %v1563, 1.442695
    %v1567 = vpow.pop %v1566
    %v1568 = vadd.f32 %v1565, 1.0
    %v1569 = vadd.f32 %v1567, 1.0
    %v1570 = vrcp.pop %v1568
    %v1571 = vmul.f32 %v1568, %v1570
    %v1572 = vsub.f32 1.0, %v1571
    %v1573 = vmul.f32 %v1570, %v1572
    %v1574 = vadd.f32 %v1570, %v1573
    %vm1575 = vweird.f32 %v1568
    %vm1576 = vweird.f32 %v1570
    %vm1577 = vmor %vm1575, %vm1576
    %v1578 = vsel %vm1577, %v1570, %v1574
    %v1579 = vand.u32 2147483647, %v1568
    %vm1580 = vcmp.eq.f32.partialorder %v1579, 8.507059e+37
    %v1581 = vand.u32 %v1568, 2147483648
    %v1582 = vor.u32 1.1754944e-38, %v1581
    %v1583 = vsel %vm1580, %v1582, %v1578
    %v1584 = vmul.f32 1.0, %v1583
    %v1585 = vrcp.pop %v1569
    %v1586 = vmul.f32 %v1569, %v1585
    %v1587 = vsub.f32 1.0, %v1586
    %v1588 = vmul.f32 %v1585, %v1587
    %v1589 = vadd.f32 %v1585, %v1588
    %vm1590 = vweird.f32 %v1569
    %vm1591 = vweird.f32 %v1585
    %vm1592 = vmor %vm1590, %vm1591
    %v1593 = vsel %vm1592, %v1585, %v1589
    %v1594 = vand.u32 2147483647, %v1569
    %vm1595 = vcmp.eq.f32.partialorder %v1594, 8.507059e+37
    %v1596 = vand.u32 %v1569, 2147483648
    %v1597 = vor.u32 1.1754944e-38, %v1596
    %v1598 = vsel %vm1595, %v1597, %v1593
    %v1599 = vmul.f32 1.0, %v1598
    %v1600 = vmul.f32 %v1584, %v1557
    %v1601 = vadd.f32 %v1519, %v1600
    %v1602 = vtanh.pop %v1601
    %v1603 = vsub.f32 1.0, %v1599
    %v1604 = vmul.f32 %v1603, %v1602
    %v1605 = vmul.f32 %v1599, %v1515
    %v1606 = vadd.f32 %v1604, %v1605
    %1607 = vst [vmem:[#allocation2 + $0x20] sm:$0xff] %v1606
    %v1608 = vld [vmem:[%s4 + $0x78] sm:$0xff]
    %v1609 = vld [vmem:[%s4 + $0x80] sm:$0xff]
    %v1610 = vld [vmem:[%s4 + $0x88] sm:$0xff]
    %v1611 = vpack.c.bf16 %v1606, %v1606
    %1612 = vmatpush.bf16.msra.mxu0 %v1130
    %1613 = vmatpush.bf16.msra.mxu0 %v1127
    %1614 = vmatpush.bf16.msra.mxu0 %v1124
    %1615 = vmatpush.bf16.msra.mxu0 %v1121
    %1616 = vmatpush.bf16.msra.mxu0 %v1118
    %1617 = vmatpush.bf16.msra.mxu0 %v1115
    %1618 = vmatpush.bf16.msra.mxu0 %v1112
    %1619 = vmatpush.bf16.msra.mxu0 %v1109
    %1620 = vmatmul.bf16.gmra.mxu0 %v1611
    %v1621 = vpop.f32.mrf.mxu0
    %v1622 = vadd.f32 %v1023, %v1621
    %v1623 = vpop.f32.mrf.mxu0
    %1624 = vdwg.mxu0
    %1625 = vmatpush.bf16.msra.mxu0 %v1131
    %1626 = vmatpush.bf16.msra.mxu0 %v1128
    %1627 = vmatpush.bf16.msra.mxu0 %v1125
    %1628 = vmatpush.bf16.msra.mxu0 %v1122
    %1629 = vmatpush.bf16.msra.mxu0 %v1119
    %1630 = vmatpush.bf16.msra.mxu0 %v1116
    %1631 = vmatpush.bf16.msra.mxu0 %v1113
    %1632 = vmatpush.bf16.msra.mxu0 %v1110
    %1633 = vmatmul.bf16.gmra.mxu0 %v1611
    %v1634 = vpop.f32.mrf.mxu0
    %v1635 = vadd.f32 %v1024, %v1634
    %v1636 = vpop.f32.mrf.mxu0
    %1637 = vdwg.mxu0
    %1638 = vmatpush.bf16.msra.mxu0 %v1132
    %1639 = vmatpush.bf16.msra.mxu0 %v1129
    %1640 = vmatpush.bf16.msra.mxu0 %v1126
    %1641 = vmatpush.bf16.msra.mxu0 %v1123
    %1642 = vmatpush.bf16.msra.mxu0 %v1120
    %1643 = vmatpush.bf16.msra.mxu0 %v1117
    %1644 = vmatpush.bf16.msra.mxu0 %v1114
    %1645 = vmatpush.bf16.msra.mxu0 %v1111
    %1646 = vmatmul.bf16.gmra.mxu0 %v1611
    %v1647 = vpop.f32.mrf.mxu0
    %v1648 = vadd.f32 %v1025, %v1647
    %v1649 = vpop.f32.mrf.mxu0
    %1650 = vdwg.mxu0
    %v1651 = vadd.f32 %v1608, %v1622
    %v1652 = vadd.f32 %v1609, %v1635
    %v1653 = vxor.u32 %v1651, 2147483648
    %v1654 = vxor.u32 %v1652, 2147483648
    %v1655 = vmul.f32 %v1653, 1.442695
    %v1656 = vpow.pop %v1655
    %v1657 = vmul.f32 %v1654, 1.442695
    %v1658 = vpow.pop %v1657
    %v1659 = vadd.f32 %v1656, 1.0
    %v1660 = vadd.f32 %v1658, 1.0
    %v1661 = vrcp.pop %v1659
    %v1662 = vmul.f32 %v1659, %v1661
    %v1663 = vsub.f32 1.0, %v1662
    %v1664 = vmul.f32 %v1661, %v1663
    %v1665 = vadd.f32 %v1661, %v1664
    %vm1666 = vweird.f32 %v1659
    %vm1667 = vweird.f32 %v1661
    %vm1668 = vmor %vm1666, %vm1667
    %v1669 = vsel %vm1668, %v1661, %v1665
    %v1670 = vand.u32 2147483647, %v1659
    %vm1671 = vcmp.eq.f32.partialorder %v1670, 8.507059e+37
    %v1672 = vand.u32 %v1659, 2147483648
    %v1673 = vor.u32 1.1754944e-38, %v1672
    %v1674 = vsel %vm1671, %v1673, %v1669
    %v1675 = vmul.f32 1.0, %v1674
    %v1676 = vrcp.pop %v1660
    %v1677 = vmul.f32 %v1660, %v1676
    %v1678 = vsub.f32 1.0, %v1677
    %v1679 = vmul.f32 %v1676, %v1678
    %v1680 = vadd.f32 %v1676, %v1679
    %vm1681 = vweird.f32 %v1660
    %vm1682 = vweird.f32 %v1676
    %vm1683 = vmor %vm1681, %vm1682
    %v1684 = vsel %vm1683, %v1676, %v1680
    %v1685 = vand.u32 2147483647, %v1660
    %vm1686 = vcmp.eq.f32.partialorder %v1685, 8.507059e+37
    %v1687 = vand.u32 %v1660, 2147483648
    %v1688 = vor.u32 1.1754944e-38, %v1687
    %v1689 = vsel %vm1686, %v1688, %v1684
    %v1690 = vmul.f32 1.0, %v1689
    %v1691 = vmul.f32 %v1675, %v1648
    %v1692 = vadd.f32 %v1610, %v1691
    %v1693 = vtanh.pop %v1692
    %v1694 = vsub.f32 1.0, %v1690
    %v1695 = vmul.f32 %v1694, %v1693
    %v1696 = vmul.f32 %v1690, %v1606
    %v1697 = vadd.f32 %v1695, %v1696
    %1698 = vst [vmem:[#allocation2 + $0x28] sm:$0xff] %v1697
    %v1699 = vld [vmem:[%s4 + $0x90] sm:$0xff]
    %v1700 = vld [vmem:[%s4 + $0x98] sm:$0xff]
    %v1701 = vld [vmem:[%s4 + $0xa0] sm:$0xff]
    %v1702 = vpack.c.bf16 %v1697, %v1697
    %1703 = vmatpush.bf16.msra.mxu0 %v1130
    %1704 = vmatpush.bf16.msra.mxu0 %v1127
    %1705 = vmatpush.bf16.msra.mxu0 %v1124
    %1706 = vmatpush.bf16.msra.mxu0 %v1121
    %1707 = vmatpush.bf16.msra.mxu0 %v1118
    %1708 = vmatpush.bf16.msra.mxu0 %v1115
    %1709 = vmatpush.bf16.msra.mxu0 %v1112
    %1710 = vmatpush.bf16.msra.mxu0 %v1109
    %1711 = vmatmul.bf16.gmra.mxu0 %v1702
    %v1712 = vpop.f32.mrf.mxu0
    %v1713 = vadd.f32 %v1023, %v1712
    %v1714 = vpop.f32.mrf.mxu0
    %1715 = vdwg.mxu0
    %1716 = vmatpush.bf16.msra.mxu0 %v1131
    %1717 = vmatpush.bf16.msra.mxu0 %v1128
    %1718 = vmatpush.bf16.msra.mxu0 %v1125
    %1719 = vmatpush.bf16.msra.mxu0 %v1122
    %1720 = vmatpush.bf16.msra.mxu0 %v1119
    %1721 = vmatpush.bf16.msra.mxu0 %v1116
    %1722 = vmatpush.bf16.msra.mxu0 %v1113
    %1723 = vmatpush.bf16.msra.mxu0 %v1110
    %1724 = vmatmul.bf16.gmra.mxu0 %v1702
    %v1725 = vpop.f32.mrf.mxu0
    %v1726 = vadd.f32 %v1024, %v1725
    %v1727 = vpop.f32.mrf.mxu0
    %1728 = vdwg.mxu0
    %1729 = vmatpush.bf16.msra.mxu0 %v1132
    %1730 = vmatpush.bf16.msra.mxu0 %v1129
    %1731 = vmatpush.bf16.msra.mxu0 %v1126
    %1732 = vmatpush.bf16.msra.mxu0 %v1123
    %1733 = vmatpush.bf16.msra.mxu0 %v1120
    %1734 = vmatpush.bf16.msra.mxu0 %v1117
    %1735 = vmatpush.bf16.msra.mxu0 %v1114
    %1736 = vmatpush.bf16.msra.mxu0 %v1111
    %1737 = vmatmul.bf16.gmra.mxu0 %v1702
    %v1738 = vpop.f32.mrf.mxu0
    %v1739 = vadd.f32 %v1025, %v1738
    %v1740 = vpop.f32.mrf.mxu0
    %1741 = vdwg.mxu0
    %v1742 = vadd.f32 %v1699, %v1713
    %v1743 = vadd.f32 %v1700, %v1726
    %v1744 = vxor.u32 %v1742, 2147483648
    %v1745 = vxor.u32 %v1743, 2147483648
    %v1746 = vmul.f32 %v1744, 1.442695
    %v1747 = vpow.pop %v1746
    %v1748 = vmul.f32 %v1745, 1.442695
    %v1749 = vpow.pop %v1748
    %v1750 = vadd.f32 %v1747, 1.0
    %v1751 = vadd.f32 %v1749, 1.0
    %v1752 = vrcp.pop %v1750
    %v1753 = vmul.f32 %v1750, %v1752
    %v1754 = vsub.f32 1.0, %v1753
    %v1755 = vmul.f32 %v1752, %v1754
    %v1756 = vadd.f32 %v1752, %v1755
    %vm1757 = vweird.f32 %v1750
    %vm1758 = vweird.f32 %v1752
    %vm1759 = vmor %vm1757, %vm1758
    %v1760 = vsel %vm1759, %v1752, %v1756
    %v1761 = vand.u32 2147483647, %v1750
    %vm1762 = vcmp.eq.f32.partialorder %v1761, 8.507059e+37
    %v1763 = vand.u32 %v1750, 2147483648
    %v1764 = vor.u32 1.1754944e-38, %v1763
    %v1765 = vsel %vm1762, %v1764, %v1760
    %v1766 = vmul.f32 1.0, %v1765
    %v1767 = vrcp.pop %v1751
    %v1768 = vmul.f32 %v1751, %v1767
    %v1769 = vsub.f32 1.0, %v1768
    %v1770 = vmul.f32 %v1767, %v1769
    %v1771 = vadd.f32 %v1767, %v1770
    %vm1772 = vweird.f32 %v1751
    %vm1773 = vweird.f32 %v1767
    %vm1774 = vmor %vm1772, %vm1773
    %v1775 = vsel %vm1774, %v1767, %v1771
    %v1776 = vand.u32 2147483647, %v1751
    %vm1777 = vcmp.eq.f32.partialorder %v1776, 8.507059e+37
    %v1778 = vand.u32 %v1751, 2147483648
    %v1779 = vor.u32 1.1754944e-38, %v1778
    %v1780 = vsel %vm1777, %v1779, %v1775
    %v1781 = vmul.f32 1.0, %v1780
    %v1782 = vmul.f32 %v1766, %v1739
    %v1783 = vadd.f32 %v1701, %v1782
    %v1784 = vtanh.pop %v1783
    %v1785 = vsub.f32 1.0, %v1781
    %v1786 = vmul.f32 %v1785, %v1784
    %v1787 = vmul.f32 %v1781, %v1697
    %v1788 = vadd.f32 %v1786, %v1787
    %1789 = vst [vmem:[#allocation2 + $0x30] sm:$0xff] %v1788
    %v1790 = vld [vmem:[%s4 + $0xa8] sm:$0xff]
    %v1791 = vld [vmem:[%s4 + $0xb0] sm:$0xff]
    %v1792 = vld [vmem:[%s4 + $0xb8] sm:$0xff]
    %v1793 = vpack.c.bf16 %v1788, %v1788
    %1794 = vmatpush.bf16.msra.mxu0 %v1130
    %1795 = vmatpush.bf16.msra.mxu0 %v1127
    %1796 = vmatpush.bf16.msra.mxu0 %v1124
    %1797 = vmatpush.bf16.msra.mxu0 %v1121
    %1798 = vmatpush.bf16.msra.mxu0 %v1118
    %1799 = vmatpush.bf16.msra.mxu0 %v1115
    %1800 = vmatpush.bf16.msra.mxu0 %v1112
    %1801 = vmatpush.bf16.msra.mxu0 %v1109
    %1802 = vmatmul.bf16.gmra.mxu0 %v1793
    %v1803 = vpop.f32.mrf.mxu0
    %v1804 = vadd.f32 %v1023, %v1803
    %v1805 = vpop.f32.mrf.mxu0
    %1806 = vdwg.mxu0
    %1807 = vmatpush.bf16.msra.mxu0 %v1131
    %1808 = vmatpush.bf16.msra.mxu0 %v1128
    %1809 = vmatpush.bf16.msra.mxu0 %v1125
    %1810 = vmatpush.bf16.msra.mxu0 %v1122
    %1811 = vmatpush.bf16.msra.mxu0 %v1119
    %1812 = vmatpush.bf16.msra.mxu0 %v1116
    %1813 = vmatpush.bf16.msra.mxu0 %v1113
    %1814 = vmatpush.bf16.msra.mxu0 %v1110
    %1815 = vmatmul.bf16.gmra.mxu0 %v1793
    %v1816 = vpop.f32.mrf.mxu0
    %v1817 = vadd.f32 %v1024, %v1816
    %v1818 = vpop.f32.mrf.mxu0
    %1819 = vdwg.mxu0
    %1820 = vmatpush.bf16.msra.mxu0 %v1132
    %1821 = vmatpush.bf16.msra.mxu0 %v1129
    %1822 = vmatpush.bf16.msra.mxu0 %v1126
    %1823 = vmatpush.bf16.msra.mxu0 %v1123
    %1824 = vmatpush.bf16.msra.mxu0 %v1120
    %1825 = vmatpush.bf16.msra.mxu0 %v1117
    %1826 = vmatpush.bf16.msra.mxu0 %v1114
    %1827 = vmatpush.bf16.msra.mxu0 %v1111
    %1828 = vmatmul.bf16.gmra.mxu0 %v1793
    %v1829 = vpop.f32.mrf.mxu0
    %v1830 = vadd.f32 %v1025, %v1829
    %v1831 = vpop.f32.mrf.mxu0
    %1832 = vdwg.mxu0
    %v1833 = vadd.f32 %v1790, %v1804
    %v1834 = vadd.f32 %v1791, %v1817
    %v1835 = vxor.u32 %v1833, 2147483648
    %v1836 = vxor.u32 %v1834, 2147483648
    %v1837 = vmul.f32 %v1835, 1.442695
    %v1838 = vpow.pop %v1837
    %v1839 = vmul.f32 %v1836, 1.442695
    %v1840 = vpow.pop %v1839
    %v1841 = vadd.f32 %v1838, 1.0
    %v1842 = vadd.f32 %v1840, 1.0
    %v1843 = vrcp.pop %v1841
    %v1844 = vmul.f32 %v1841, %v1843
    %v1845 = vsub.f32 1.0, %v1844
    %v1846 = vmul.f32 %v1843, %v1845
    %v1847 = vadd.f32 %v1843, %v1846
    %vm1848 = vweird.f32 %v1841
    %vm1849 = vweird.f32 %v1843
    %vm1850 = vmor %vm1848, %vm1849
    %v1851 = vsel %vm1850, %v1843, %v1847
    %v1852 = vand.u32 2147483647, %v1841
    %vm1853 = vcmp.eq.f32.partialorder %v1852, 8.507059e+37
    %v1854 = vand.u32 %v1841, 2147483648
    %v1855 = vor.u32 1.1754944e-38, %v1854
    %v1856 = vsel %vm1853, %v1855, %v1851
    %v1857 = vmul.f32 1.0, %v1856
    %v1858 = vrcp.pop %v1842
    %v1859 = vmul.f32 %v1842, %v1858
    %v1860 = vsub.f32 1.0, %v1859
    %v1861 = vmul.f32 %v1858, %v1860
    %v1862 = vadd.f32 %v1858, %v1861
    %vm1863 = vweird.f32 %v1842
    %vm1864 = vweird.f32 %v1858
    %vm1865 = vmor %vm1863, %vm1864
    %v1866 = vsel %vm1865, %v1858, %v1862
    %v1867 = vand.u32 2147483647, %v1842
    %vm1868 = vcmp.eq.f32.partialorder %v1867, 8.507059e+37
    %v1869 = vand.u32 %v1842, 2147483648
    %v1870 = vor.u32 1.1754944e-38, %v1869
    %v1871 = vsel %vm1868, %v1870, %v1866
    %v1872 = vmul.f32 1.0, %v1871
    %v1873 = vmul.f32 %v1857, %v1830
    %v1874 = vadd.f32 %v1792, %v1873
    %v1875 = vtanh.pop %v1874
    %v1876 = vsub.f32 1.0, %v1872
    %v1877 = vmul.f32 %v1876, %v1875
    %v1878 = vmul.f32 %v1872, %v1788
    %v1879 = vadd.f32 %v1877, %v1878
    %1880 = vst [vmem:[#allocation2 + $0x38] sm:$0xff] %v1879
    %1881 = vst [vmem:[#allocation5] sm:$0xff] %v1879
    %v1882 = vld [vmem:[#allocation2] sm:$0xff]
    %v1883 = vld [vmem:[#allocation2 + $0x8] sm:$0xff]
    %v1884 = vld [vmem:[#allocation2 + $0x10] sm:$0xff]
    %v1885 = vld [vmem:[#allocation2 + $0x18] sm:$0xff]
    %v1886 = vld [vmem:[#allocation2 + $0x20] sm:$0xff]
    %v1887 = vld [vmem:[#allocation2 + $0x28] sm:$0xff]
    %v1888 = vld [vmem:[#allocation2 + $0x30] sm:$0xff]
    %v1889 = vld [vmem:[#allocation2 + $0x38] sm:$0xff]
    %v1890 = vpack.c.bf16 %v1883, %v1882
    %v1891 = vpack.c.bf16 %v1885, %v1884
    %v1892 = vpack.c.bf16 %v1887, %v1886
    %v1893 = vpack.c.bf16 %v1889, %v1888
    %v1894 = vld [vmem:[%s7] sm:$0xf]
    %v1895 = vld [vmem:[%s7 + $0x4] sm:$0xf]
    %v1896 = vld [vmem:[%s7 + $0x8] sm:$0xf]
    %v1897 = vld [vmem:[%s7 + $0xc] sm:$0xf]
    %v1898 = vld [vmem:[%s7 + $0x10] sm:$0xf]
    %v1899 = vld [vmem:[%s7 + $0x14] sm:$0xf]
    %v1900 = vld [vmem:[%s7 + $0x18] sm:$0xf]
    %v1901 = vld [vmem:[%s7 + $0x1c] sm:$0xf]
    %v1902 = vld [vmem:[%s7 + $0x20] sm:$0xf]
    %v1903 = vld [vmem:[%s7 + $0x24] sm:$0xf]
    %v1904 = vld [vmem:[%s7 + $0x28] sm:$0xf]
    %v1905 = vld [vmem:[%s7 + $0x2c] sm:$0xf]
    %v1906 = vld [vmem:[%s7 + $0x30] sm:$0xf]
    %v1907 = vld [vmem:[%s7 + $0x34] sm:$0xf]
    %v1908 = vld [vmem:[%s7 + $0x38] sm:$0xf]
    %v1909 = vld [vmem:[%s7 + $0x3c] sm:$0xf]
    %v1910 = vld [vmem:[%s8] sm:$0x1]
    %v1912 = vperm.slane %v1910, 0
    %v1930 = vunpack.c.l.b16 %v1894
    %v1931 = vunpack.c.l.b16 %v1895
    %v1932 = vunpack.c.l.b16 %v1896
    %v1933 = vunpack.c.l.b16 %v1897
    %v1934 = vunpack.c.l.b16 %v1898
    %v1935 = vunpack.c.l.b16 %v1899
    %v1936 = vunpack.c.l.b16 %v1900
    %v1937 = vunpack.c.l.b16 %v1901
    %v1938 = vunpack.c.l.b16 %v1902
    %v1939 = vunpack.c.l.b16 %v1903
    %v1940 = vunpack.c.l.b16 %v1904
    %v1941 = vunpack.c.l.b16 %v1905
    %v1942 = vunpack.c.l.b16 %v1906
    %v1943 = vunpack.c.l.b16 %v1907
    %v1944 = vunpack.c.l.b16 %v1908
    %v1945 = vunpack.c.l.b16 %v1909
    %v1946 = vpack.c.b16 %v1931, %v1930
    %v1947 = vpack.c.b16 %v1933, %v1932
    %v1948 = vpack.c.b16 %v1935, %v1934
    %v1949 = vpack.c.b16 %v1937, %v1936
    %v1950 = vpack.c.b16 %v1939, %v1938
    %v1951 = vpack.c.b16 %v1941, %v1940
    %v1952 = vpack.c.b16 %v1943, %v1942
    %v1953 = vpack.c.b16 %v1945, %v1944
    %1962 = vmatpush.bf16.msra.mxu0 %v1953
    %1963 = vmatpush.bf16.msra.mxu0 %v1952
    %1964 = vmatpush.bf16.msra.mxu0 %v1951
    %1965 = vmatpush.bf16.msra.mxu0 %v1950
    %1966 = vmatpush.bf16.msra.mxu0 %v1949
    %1967 = vmatpush.bf16.msra.mxu0 %v1948
    %1968 = vmatpush.bf16.msra.mxu0 %v1947
    %1969 = vmatpush.bf16.msra.mxu0 %v1946
    %1970 = vmatmul.bf16.gmra.mxu0 %v1890
    %v1971 = vpop.f32.mrf.mxu0
    %v1972 = vadd.f32 %v1912, %v1971
    %v1973 = vpop.f32.mrf.mxu0
    %v1974 = vadd.f32 %v1912, %v1973
    %1975 = vmatmul.bf16.gmra.mxu0 %v1891
    %v1976 = vpop.f32.mrf.mxu0
    %v1977 = vadd.f32 %v1912, %v1976
    %v1978 = vpop.f32.mrf.mxu0
    %v1979 = vadd.f32 %v1912, %v1978
    %1980 = vmatmul.bf16.gmra.mxu0 %v1892
    %v1981 = vpop.f32.mrf.mxu0
    %v1982 = vadd.f32 %v1912, %v1981
    %v1983 = vpop.f32.mrf.mxu0
    %v1984 = vadd.f32 %v1912, %v1983
    %1985 = vmatmul.bf16.gmra.mxu0 %v1893
    %v1986 = vpop.f32.mrf.mxu0
    %v1987 = vadd.f32 %v1912, %v1986
    %v1988 = vpop.f32.mrf.mxu0
    %v1989 = vadd.f32 %v1912, %v1988
    %1990 = vdwg.mxu0
    %1991 = vst [vmem:[#allocation3] sm:$0xff] %v1972
    %1992 = vst [vmem:[#allocation3 + $0x8] sm:$0xff] %v1974
    %1993 = vst [vmem:[#allocation3 + $0x10] sm:$0xff] %v1977
    %1994 = vst [vmem:[#allocation3 + $0x18] sm:$0xff] %v1979
    %1995 = vst [vmem:[#allocation3 + $0x20] sm:$0xff] %v1982
    %1996 = vst [vmem:[#allocation3 + $0x28] sm:$0xff] %v1984
    %1997 = vst [vmem:[#allocation3 + $0x30] sm:$0xff] %v1987
    %1998 = vst [vmem:[#allocation3 + $0x38] sm:$0xff] %v1989
    // Predicated region
    $region38: #{seq2seq_forward.1} parent=1 // pred_check
      _
    $region39: #{seq2seq_forward.1} parent=1 // pred_check_branch
      %2000 = sbr.rel (0) target = $region41
    $region40: #{seq2seq_forward.1} parent=1 // pred_region
      %2002 = vsyncadd [#allocation4], 0
      %s2003 = sshll.u32 [#allocation3], 4
      %s2004 = int_to_ptr.vmem [resolvable:$true] %s2003
      %s2005 = sshll.u32 %s9, 4
      %s2006 = int_to_ptr.hbm [resolvable:$true] %s2005
      %2011 = dma.vmem_to_hbm [thread:$0]  %s2004, 1024, %s2006, [#allocation4], 128, 128, 8
    $region41: #{seq2seq_forward.1} parent=1 // pred_fallthru
      _
    // Predicated region
    $region42: #{seq2seq_forward.1} parent=1 // pred_check
      _
    $region43: #{seq2seq_forward.1} parent=1 // pred_check_branch
      %2013 = sbr.rel (0) target = $region45
    $region44: #{seq2seq_forward.1} parent=1 // pred_region
      %2015 = vsyncadd [#allocation6], 0
      %s2017 = sshll.u32 [#allocation5], 4
      %s2018 = int_to_ptr.vmem [resolvable:$true] %s2017
      %s2019 = sshll.u32 %s10, 4
      %s2020 = int_to_ptr.hbm [resolvable:$true] %s2019
      %2022 = dma.vmem_to_hbm [thread:$0]  %s2018, 128, %s2020, [#allocation6]
    $region45: #{seq2seq_forward.1} parent=1 // pred_fallthru
      _
    // Predicated region
    $region46: #{seq2seq_forward.1} parent=1 // pred_check
      _
    $region47: #{seq2seq_forward.1} parent=1 // pred_check_branch
      %2024 = sbr.rel (0) target = $region49
    $region48: #{seq2seq_forward.1} parent=1 // pred_region
      %2026 = dma.done [#allocation4], 1024
    $region49: #{seq2seq_forward.1} parent=1 // pred_fallthru
      _
    // Predicated region
    $region50: #{seq2seq_forward.1} parent=1 // pred_check
      _
    $region51: #{seq2seq_forward.1} parent=1 // pred_check_branch
      %2028 = sbr.rel (0) target = $region53
    $region52: #{seq2seq_forward.1} parent=1 // pred_region
      %2030 = dma.done [#allocation6], 128
    $region53: #{seq2seq_forward.1} parent=1 // pred_fallthru
      _
    %2031 = vsyncpa [#allocation4], 1
    %2032 = vsyncpa [#allocation6], 1

</llo_original>
